<compile_context>
chip_gen: v7x
topology: tpu7x:2x2x1
jax: 0.10.0
libtpu: 0.0.40
codegen_flags: <defaults>
</compile_context>

<pallas_src>
import math
import functools
import numpy as np
import jax
import jax.numpy as jnp
from jax import lax
from jax.experimental import pallas as pl
from jax.experimental.pallas import tpu as pltpu


# type-A mask: mask[0,:]=1, mask[1,0]=1 -> only these 4 of the 9 taps are nonzero
LIVE_TAPS = ((0, 0), (0, 1), (0, 2), (1, 0))


# ------------------------------- helpers ------------------------------------

def _round_up(n, m):
    return ((n + m - 1) // m) * m


def _pick_tile(n, tile_cfg):
    """Row-tile size (multiple of 8, <= tile_cfg) and padded row count."""
    t = min(tile_cfg, _round_up(n, 8))
    return t, _round_up(n, t)


def _pad_rows(x, n_pad):
    n = x.shape[0]
    if n_pad == n:
        return x
    return jnp.pad(x, ((0, n_pad - n),) + ((0, 0),) * (x.ndim - 1))


# ----------------------------- Pallas kernels -------------------------------

def _encoder_kernel(x_ref, w_ref, b_ref, o_ref):
    # y = relu(x @ w + b); bf16 MXU operands, f32 accumulation, bf16 store.
    y = jnp.dot(x_ref[...], w_ref[...], preferred_element_type=jnp.float32) + b_ref[...]
    o_ref[...] = jnp.maximum(y, 0.0).astype(o_ref.dtype)


def _reg_fused_kernel(p_ref, w1_ref, b1_ref, w2_ref, b2_ref, o_ref):
    # Fused masked-conv (im2col matmul over the 4 live taps) + ReLU + 1x1 conv.
    # The (tm, hidden) intermediate stays in VMEM/vregs (no HBM round trip).
    h = jnp.dot(p_ref[...], w1_ref[...], preferred_element_type=jnp.float32) + b1_ref[...]
    h = jnp.maximum(h, 0.0)
    y = jnp.dot(h.astype(jnp.bfloat16), w2_ref[...],
                preferred_element_type=jnp.float32) + b2_ref[...]
    o_ref[...] = y.astype(o_ref.dtype)


def _cpc_head_kernel(ct_ref, pw_ref, pb_ref, encT_ref, out_ref):
    """One prediction head + its slice of the CPC InfoNCE head (grid axis = k).

    ct:   (N, D)    bf16  context row c_t (same block for every head)
    pw:   (1, D, D) bf16  this head's weights, (in, out) layout
    pb:   (1, 1, D) f32   this head's bias
    encT: (1, D, N) bf16  this head's ground-truth encodings, pre-transposed
    out:  (1, 1, 128) f32: [0,0,0] = sum(diag(log_softmax(total, dim=1)))
                           [0,0,1] = mean(argmax(total, dim=1) == arange(N))
    """
    N = ct_ref.shape[0]

    # prediction head: pred = c_t @ W + b (bf16 MXU operands, f32 accumulation)
    pred = jnp.dot(ct_ref[...], pw_ref[0],
                   preferred_element_type=jnp.float32) + pb_ref[0]
    # logits: total = pred @ enc^T (enc pre-transposed -> plain dot, no XLU)
    total = jnp.dot(pred.astype(jnp.bfloat16), encT_ref[0],
                    preferred_element_type=jnp.float32)            # (N, N) f32

    row = lax.broadcasted_iota(jnp.int32, (N, N), 0)
    col = lax.broadcasted_iota(jnp.int32, (N, N), 1)
    diag = row == col
    before = col < row                                             # strictly left of diag

    row_max = jnp.max(total, axis=1, keepdims=True)                            # (N, 1)
    lse = jnp.log(jnp.sum(jnp.exp(total - row_max), axis=1, keepdims=True))    # (N, 1)

    # diag(log_softmax) without materializing the full (N,N) log-softmax
    diag_val = jnp.sum(jnp.where(diag, total, 0.0), axis=1, keepdims=True)     # (N, 1)
    nce_i = jnp.sum(diag_val - row_max - lse)

    # accuracy with first-index-argmax semantics (matches torch.argmax ties):
    # row r is correct iff total[r,r] is a row max and no earlier column ties it.
    # diag hit computed on (N,1) vectors (no extra O(N^2) select / row reduce).
    is_max = total >= row_max
    earlier = jnp.sum(jnp.where(before & is_max, 1.0, 0.0), axis=1, keepdims=True)
    diag_hit = diag_val >= row_max                                              # (N, 1) bool
    correct = jnp.where(diag_hit & (earlier == 0.0), 1.0, 0.0)
    acc_i = jnp.sum(correct) * (1.0 / N)

    # lane-dense scalar slab: element 0 = nce term, element 1 = accuracy
    lane = lax.broadcasted_iota(jnp.int32, (1, 1, 128), 2)
    out_ref[...] = jnp.where(lane == 0, nce_i, jnp.where(lane == 1, acc_i, 0.0))


# ------------------------------ wrappers -------------------------------------

def encoder_forward(x_flat, w, b, *, tile_m=256):
    """x_flat:(N,Din) bf16, w:(Din,Dout) bf16, b:(Dout,) f32 -> (N,Dout) bf16."""
    N, Din = x_flat.shape
    Dout = w.shape[1]
    tm, n_pad = _pick_tile(N, tile_m)
    xp = _pad_rows(x_flat, n_pad)
    y = pl.pallas_call(
        _encoder_kernel,
        out_shape=jax.ShapeDtypeStruct((n_pad, Dout), jnp.bfloat16),
        grid=(n_pad // tm,),
        in_specs=[
            pl.BlockSpec((tm, Din), lambda i: (i, 0)),
            pl.BlockSpec((Din, Dout), lambda i: (0, 0)),
            pl.BlockSpec((1, Dout), lambda i: (0, 0)),
        ],
        out_specs=pl.BlockSpec((tm, Dout), lambda i: (i, 0)),
        compiler_params=pltpu.CompilerParams(dimension_semantics=("parallel",)),
    )(xp, w, b.reshape(1, Dout))
    return y[:N]


def _context_row_patches(z, pred_id):
    """Eval-path im2col for ONLY the consumed context row (pred_id+1).

    The type-A masked 3x3 conv at output row r needs input rows r-1, r and a
    1-column horizontal halo; restricting to this 2-row band cuts the MaskCNN
    matmul FLOPs/DMA by ~rows x and makes the im2col buffer negligible
    (bs*cols x 4*C instead of bs*rows*cols x 4*C).
    """
    B, R, W, C = z.shape
    r = pred_id + 1
    two = z[:, r - 1:r + 1, :, :]                        # (B, 2, W, C)
    twop = jnp.pad(two, ((0, 0), (0, 0), (1, 1), (0, 0)))
    taps = [twop[:, dh, dw:dw + W, :] for dh, dw in LIVE_TAPS]   # each (B, W, C)
    return jnp.concatenate(taps, axis=-1).reshape(B * W, len(LIVE_TAPS) * C)


def reg_forward(patches, w1_flat, b1, w2, b2, *, tile_m=256):
    """Fused masked-conv + 1x1 conv on the im2col rows. bf16 in/out, f32 acc."""
    N, Kin = patches.shape
    Hd = w1_flat.shape[1]
    Dout = w2.shape[1]
    tm, n_pad = _pick_tile(N, tile_m)
    pp = _pad_rows(patches, n_pad)
    y = pl.pallas_call(
        _reg_fused_kernel,
        out_shape=jax.ShapeDtypeStruct((n_pad, Dout), jnp.bfloat16),
        grid=(n_pad // tm,),
        in_specs=[
            pl.BlockSpec((tm, Kin), lambda i: (i, 0)),
            pl.BlockSpec((Kin, Hd), lambda i: (0, 0)),
            pl.BlockSpec((1, Hd), lambda i: (0, 0)),
            pl.BlockSpec((Hd, Dout), lambda i: (0, 0)),
            pl.BlockSpec((1, Dout), lambda i: (0, 0)),
        ],
        out_specs=pl.BlockSpec((tm, Dout), lambda i: (i, 0)),
        compiler_params=pltpu.CompilerParams(dimension_semantics=("parallel",)),
    )(pp, w1_flat, b1.reshape(1, Hd), w2, b2.reshape(1, Dout))
    return y[:N]


def cpc_fused_head(c_t, pred_w, pred_b, encs_T):
    """c_t:(N,D) bf16, pred_w:(k,D,D) bf16, pred_b:(k,1,D) f32, encs_T:(k,D,N) bf16
    -> (k, 1, 128) f32 scalar slabs ([...,0]=nce term, [...,1]=accuracy)."""
    N, D = c_t.shape
    k = pred_w.shape[0]
    return pl.pallas_call(
        _cpc_head_kernel,
        out_shape=jax.ShapeDtypeStruct((k, 1, 128), jnp.float32),
        grid=(k,),
        in_specs=[
            pl.BlockSpec((N, D), lambda i: (0, 0)),
            pl.BlockSpec((1, D, D), lambda i: (i, 0, 0)),
            pl.BlockSpec((1, 1, D), lambda i: (i, 0, 0)),
            pl.BlockSpec((1, D, N), lambda i: (i, 0, 0)),
        ],
        out_specs=pl.BlockSpec((1, 1, 128), lambda i: (i, 0, 0)),
        compiler_params=pltpu.CompilerParams(dimension_semantics=("parallel",)),
    )(c_t, pred_w, pred_b, encs_T)


# --------------------------- parameter set-up --------------------------------

def make_params(key, c_hw_flat, input_size, hidden_size, k):
    ks = jax.random.split(key, 4 + k)

    def kaiming(subkey, shape, fan):
        return (math.sqrt(2.0) / math.sqrt(fan)) * jax.random.normal(
            subkey, shape, dtype=jnp.float32)

    params = {}
    # encoder stand-in: Linear(C*H*W -> input_size), stored (in, out), bf16 MXU operand
    params["enc_w"] = kaiming(ks[0], (c_hw_flat, input_size),
                              c_hw_flat).astype(jnp.bfloat16)
    params["enc_b"] = jnp.zeros((input_size,), jnp.float32)

    # MaskCNN stand-in, conv1: type-A masked 3x3, input_size -> hidden_size.
    # Only the 4 live taps are kept (the other 5 im2col weight rows are zero).
    w1 = kaiming(ks[1], (hidden_size, input_size, 3, 3), 9 * input_size)
    params["reg_w1"] = jnp.concatenate(
        [jnp.transpose(w1[:, :, dh, dw], (1, 0)) for dh, dw in LIVE_TAPS], axis=0
    ).astype(jnp.bfloat16)                                   # (4*cin, cout)
    params["reg_b1"] = jnp.zeros((hidden_size,), jnp.float32)

    # MaskCNN stand-in, conv2: 1x1, hidden_size -> input_size.
    w2 = kaiming(ks[2], (input_size, hidden_size), hidden_size)
    params["reg_w2"] = jnp.transpose(w2, (1, 0)).astype(jnp.bfloat16)
    params["reg_b2"] = jnp.zeros((input_size,), jnp.float32)

    # k prediction heads (kaiming_normal_, fan_out, relu -> std sqrt(2/input_size)).
    # bf16 weights (MXU operands); biases kept f32 and added on the f32 accumulator.
    params["pred_w"] = jnp.stack(
        [kaiming(ks[3 + i], (input_size, input_size), input_size) for i in range(k)]
    ).astype(jnp.bfloat16)
    params["pred_b"] = jnp.zeros((k, 1, input_size), jnp.float32)
    return params


# ------------------------------- forward -------------------------------------

def cpc_forward(x, params, *, seq_len=49, input_size=32, k=3,
                enc_tile=64, reg_tile=256):
    rows = int(math.sqrt(seq_len))
    cols = int(math.sqrt(seq_len))
    bs = x.shape[0] // seq_len

    # encoder stand-in (bf16 activations fed in; bf16 z out)
    x_flat = x.reshape(x.shape[0], -1).astype(jnp.bfloat16)
    z = encoder_forward(x_flat, params["enc_w"], params["enc_b"], tile_m=enc_tile)
    z = z.reshape(bs, rows, cols, input_size)

    pred_id = 3  # eval path: torch.tensor([3])

    # ground-truth encodings for the k future rows, pre-transposed to (k, D, N)
    # so the in-kernel logits matmul is a plain jnp.dot (no in-kernel transpose).
    encs = jnp.stack([
        z[:, pred_id + 1 + i, :, :].reshape(bs * cols, input_size) for i in range(k)])
    encs_T = jnp.transpose(encs, (0, 2, 1))                   # (k, D, N) bf16

    # autoregressor stand-in (MaskCNN): only the consumed context row is computed
    patches = _context_row_patches(z, pred_id)
    c_t = reg_forward(patches, params["reg_w1"], params["reg_b1"],
                      params["reg_w2"], params["reg_b2"],
                      tile_m=reg_tile)                        # (bs*cols, D) bf16

    # fused {k prediction heads + CPC InfoNCE head}, k-parallel grid
    head = cpc_fused_head(c_t, params["pred_w"], params["pred_b"], encs_T)  # (k,1,128)

    nce = jnp.sum(head[:, 0, 0]) / (-1.0 * bs * cols * k)
    accuracy = head[:, 0, 1]  # (k,) device array; no host sync inside the forward
    return nce, accuracy


# --------------------------------- main ---------------------------------------

if __name__ == "__main__":
    seq_len = 49          # fixed by the module (7 x 7 grid of patches)
    bs = 2
    C, Hp, Wp = 3, 8, 8   # small patch images
    input_size = 32       # encoding size (module default 1024, scaled down)
    hidden_size = 16      # MaskCNN hidden (module default 128, scaled down)
    k = 3                 # prediction length

    key = jax.random.PRNGKey(0)
    kx, kp = jax.random.split(key)
    x = jax.random.normal(kx, (bs * seq_len, C, Hp, Wp), dtype=jnp.float32)

    params = make_params(kp, C * Hp * Wp, input_size, hidden_size, k)

    # enc_tile=64 -> a real 2-step "parallel" row grid even at the demo size;
    # at module sizes (input_size=1024, large bs) raise toward 256 (v7x) / 512
    # (v5e, v6e) to stay inside the scoped-VMEM budget while maximizing tiles.
    fwd = jax.jit(functools.partial(cpc_forward, seq_len=seq_len,
                                    input_size=input_size, k=k,
                                    enc_tile=64, reg_tile=256))
    nce, accuracy = fwd(x, params)
    jax.block_until_ready((nce, accuracy))

    acc_np = np.asarray(jax.device_get(accuracy))
    assert np.isfinite(float(nce))
    assert acc_np.shape == (k,)
    assert np.all((acc_np >= 0.0) & (acc_np <= 1.0))
    print("KERNEL_OK")
</pallas_src>

<mosaic_0001>
module attributes {stable_mosaic.version = 11 : i64} {
  func.func @_encoder_kernel(%arg0: i32, %arg1: memref<64x192xbf16, #tpu.memory_space<vmem>>, %arg2: memref<192x32xbf16, #tpu.memory_space<vmem>>, %arg3: memref<1x32xf32, #tpu.memory_space<vmem>>, %arg4: memref<64x32xbf16, #tpu.memory_space<vmem>>) attributes {dimension_semantics = [#tpu.dimension_semantics<parallel>], iteration_bounds = array<i64: 2>, scalar_prefetch = 0 : i64, scratch_operands = 0 : i64, tpu.core_type = #tpu.core_type<tc>, window_params = [{transform_indices = @transform_0, window_bounds = array<i64: 64, 192>}, {pipeline_mode = #tpu.pipeline_mode<synchronous>, transform_indices = @transform_1, window_bounds = array<i64: 192, 32>}, {pipeline_mode = #tpu.pipeline_mode<synchronous>, transform_indices = @transform_2, window_bounds = array<i64: 1, 32>}, {transform_indices = @transform_3, window_bounds = array<i64: 64, 32>}]} {
    %c0 = arith.constant 0 : index
    %c0_0 = arith.constant 0 : index
    %0 = vector.load %arg1[%c0, %c0_0] : memref<64x192xbf16, #tpu.memory_space<vmem>>, vector<64x192xbf16>
    %c0_1 = arith.constant 0 : index
    %c0_2 = arith.constant 0 : index
    %1 = vector.load %arg2[%c0_1, %c0_2] : memref<192x32xbf16, #tpu.memory_space<vmem>>, vector<192x32xbf16>
    %cst = arith.constant dense<0.000000e+00> : vector<64x32xf32>
    %2 = tpu.matmul %0, %1, %cst {dimension_numbers = #tpu.dot_dimension_numbers<[1], [0], [0], [1], [0, 0, 1, 1], [], []>} : vector<64x192xbf16>, vector<192x32xbf16>, vector<64x32xf32> -> vector<64x32xf32>
    %c0_3 = arith.constant 0 : index
    %c0_4 = arith.constant 0 : index
    %3 = vector.load %arg3[%c0_3, %c0_4] : memref<1x32xf32, #tpu.memory_space<vmem>>, vector<1x32xf32>
    %4 = vector.broadcast %3 : vector<1x32xf32> to vector<64x32xf32>
    %5 = arith.addf %2, %4 : vector<64x32xf32>
    %cst_5 = arith.constant 0.000000e+00 : f32
    %6 = vector.broadcast %cst_5 : f32 to vector<64x32xf32>
    %7 = arith.maximumf %5, %6 : vector<64x32xf32>
    %8 = arith.truncf %7 : vector<64x32xf32> to vector<64x32xbf16>
    %c0_6 = arith.constant 0 : index
    %c0_7 = arith.constant 0 : index
    %9 = vector.load %arg4[%c0_6, %c0_7] : memref<64x32xbf16, #tpu.memory_space<vmem>>, vector<64x32xbf16>
    tpu.vector_store %arg4[%c0_6, %c0_7], %8 {strides = array<i32>} : memref<64x32xbf16, #tpu.memory_space<vmem>>, vector<64x32xbf16>,
    return
  }
  func.func @transform_0(%arg0: i32) -> (i32, i32) {
    %c0_i32 = arith.constant 0 : i32
    %c0_i32_0 = arith.constant 0 : i32
    return %arg0, %c0_i32 : i32, i32
  }
  func.func @transform_1(%arg0: i32) -> (i32, i32) {
    %c0_i32 = arith.constant 0 : i32
    %c0_i32_0 = arith.constant 0 : i32
    %c0_i32_1 = arith.constant 0 : i32
    return %c0_i32, %c0_i32_0 : i32, i32
  }
  func.func @transform_2(%arg0: i32) -> (i32, i32) {
    %c0_i32 = arith.constant 0 : i32
    %c0_i32_0 = arith.constant 0 : i32
    %c0_i32_1 = arith.constant 0 : i32
    return %c0_i32, %c0_i32_0 : i32, i32
  }
  func.func @transform_3(%arg0: i32) -> (i32, i32) {
    %c0_i32 = arith.constant 0 : i32
    %c0_i32_0 = arith.constant 0 : i32
    return %arg0, %c0_i32 : i32, i32
  }
}

module attributes {stable_mosaic.version = 11 : i64} {
  func.func @_reg_fused_kernel(%arg0: i32, %arg1: memref<16x128xbf16, #tpu.memory_space<vmem>>, %arg2: memref<128x16xbf16, #tpu.memory_space<vmem>>, %arg3: memref<1x16xf32, #tpu.memory_space<vmem>>, %arg4: memref<16x32xbf16, #tpu.memory_space<vmem>>, %arg5: memref<1x32xf32, #tpu.memory_space<vmem>>, %arg6: memref<16x32xbf16, #tpu.memory_space<vmem>>) attributes {dimension_semantics = [#tpu.dimension_semantics<parallel>], iteration_bounds = array<i64: 1>, scalar_prefetch = 0 : i64, scratch_operands = 0 : i64, tpu.core_type = #tpu.core_type<tc>, window_params = [{transform_indices = @transform_0, window_bounds = array<i64: 16, 128>}, {pipeline_mode = #tpu.pipeline_mode<synchronous>, transform_indices = @transform_1, window_bounds = array<i64: 128, 16>}, {pipeline_mode = #tpu.pipeline_mode<synchronous>, transform_indices = @transform_2, window_bounds = array<i64: 1, 16>}, {pipeline_mode = #tpu.pipeline_mode<synchronous>, transform_indices = @transform_3, window_bounds = array<i64: 16, 32>}, {pipeline_mode = #tpu.pipeline_mode<synchronous>, transform_indices = @transform_4, window_bounds = array<i64: 1, 32>}, {transform_indices = @transform_5, window_bounds = array<i64: 16, 32>}]} {
    %c0 = arith.constant 0 : index
    %c0_0 = arith.constant 0 : index
    %0 = vector.load %arg1[%c0, %c0_0] : memref<16x128xbf16, #tpu.memory_space<vmem>>, vector<16x128xbf16>
    %c0_1 = arith.constant 0 : index
    %c0_2 = arith.constant 0 : index
    %1 = vector.load %arg2[%c0_1, %c0_2] : memref<128x16xbf16, #tpu.memory_space<vmem>>, vector<128x16xbf16>
    %cst = arith.constant dense<0.000000e+00> : vector<16x16xf32>
    %2 = tpu.matmul %0, %1, %cst {dimension_numbers = #tpu.dot_dimension_numbers<[1], [0], [0], [1], [0, 0, 1, 1], [], []>} : vector<16x128xbf16>, vector<128x16xbf16>, vector<16x16xf32> -> vector<16x16xf32>
    %c0_3 = arith.constant 0 : index
    %c0_4 = arith.constant 0 : index
    %3 = vector.load %arg3[%c0_3, %c0_4] : memref<1x16xf32, #tpu.memory_space<vmem>>, vector<1x16xf32>
    %4 = vector.broadcast %3 : vector<1x16xf32> to vector<16x16xf32>
    %5 = arith.addf %2, %4 : vector<16x16xf32>
    %cst_5 = arith.constant 0.000000e+00 : f32
    %6 = vector.broadcast %cst_5 : f32 to vector<16x16xf32>
    %7 = arith.maximumf %5, %6 : vector<16x16xf32>
    %8 = arith.truncf %7 : vector<16x16xf32> to vector<16x16xbf16>
    %c0_6 = arith.constant 0 : index
    %c0_7 = arith.constant 0 : index
    %9 = vector.load %arg4[%c0_6, %c0_7] : memref<16x32xbf16, #tpu.memory_space<vmem>>, vector<16x32xbf16>
    %cst_8 = arith.constant dense<0.000000e+00> : vector<16x32xf32>
    %10 = tpu.matmul %8, %9, %cst_8 {dimension_numbers = #tpu.dot_dimension_numbers<[1], [0], [0], [1], [0, 0, 1, 1], [], []>} : vector<16x16xbf16>, vector<16x32xbf16>, vector<16x32xf32> -> vector<16x32xf32>
    %c0_9 = arith.constant 0 : index
    %c0_10 = arith.constant 0 : index
    %11 = vector.load %arg5[%c0_9, %c0_10] : memref<1x32xf32, #tpu.memory_space<vmem>>, vector<1x32xf32>
    %12 = vector.broadcast %11 : vector<1x32xf32> to vector<16x32xf32>
    %13 = arith.addf %10, %12 : vector<16x32xf32>
    %14 = arith.truncf %13 : vector<16x32xf32> to vector<16x32xbf16>
    %c0_11 = arith.constant 0 : index
    %c0_12 = arith.constant 0 : index
    %15 = vector.load %arg6[%c0_11, %c0_12] : memref<16x32xbf16, #tpu.memory_space<vmem>>, vector<16x32xbf16>
    tpu.vector_store %arg6[%c0_11, %c0_12], %14 {strides = array<i32>} : memref<16x32xbf16, #tpu.memory_space<vmem>>, vector<16x32xbf16>,
    return
  }
  func.func @transform_0(%arg0: i32) -> (i32, i32) {
    %c0_i32 = arith.constant 0 : i32
    %c0_i32_0 = arith.constant 0 : i32
    return %arg0, %c0_i32 : i32, i32
  }
  func.func @transform_1(%arg0: i32) -> (i32, i32) {
    %c0_i32 = arith.constant 0 : i32
    %c0_i32_0 = arith.constant 0 : i32
    %c0_i32_1 = arith.constant 0 : i32
    return %c0_i32, %c0_i32_0 : i32, i32
  }
  func.func @transform_2(%arg0: i32) -> (i32, i32) {
    %c0_i32 = arith.constant 0 : i32
    %c0_i32_0 = arith.constant 0 : i32
    %c0_i32_1 = arith.constant 0 : i32
    return %c0_i32, %c0_i32_0 : i32, i32
  }
  func.func @transform_3(%arg0: i32) -> (i32, i32) {
    %c0_i32 = arith.constant 0 : i32
    %c0_i32_0 = arith.constant 0 : i32
    %c0_i32_1 = arith.constant 0 : i32
    return %c0_i32, %c0_i32_0 : i32, i32
  }
  func.func @transform_4(%arg0: i32) -> (i32, i32) {
    %c0_i32 = arith.constant 0 : i32
    %c0_i32_0 = arith.constant 0 : i32
    %c0_i32_1 = arith.constant 0 : i32
    return %c0_i32, %c0_i32_0 : i32, i32
  }
  func.func @transform_5(%arg0: i32) -> (i32, i32) {
    %c0_i32 = arith.constant 0 : i32
    %c0_i32_0 = arith.constant 0 : i32
    return %arg0, %c0_i32 : i32, i32
  }
}

module attributes {stable_mosaic.version = 11 : i64} {
  func.func @_cpc_head_kernel(%arg0: i32, %arg1: memref<14x32xbf16, #tpu.memory_space<vmem>>, %arg2: memref<1x32x32xbf16, #tpu.memory_space<vmem>>, %arg3: memref<1x1x32xf32, #tpu.memory_space<vmem>>, %arg4: memref<1x32x14xbf16, #tpu.memory_space<vmem>>, %arg5: memref<1x1x128xf32, #tpu.memory_space<vmem>>) attributes {dimension_semantics = [#tpu.dimension_semantics<parallel>], iteration_bounds = array<i64: 3>, scalar_prefetch = 0 : i64, scratch_operands = 0 : i64, tpu.core_type = #tpu.core_type<tc>, window_params = [{pipeline_mode = #tpu.pipeline_mode<synchronous>, transform_indices = @transform_0, window_bounds = array<i64: 14, 32>}, {transform_indices = @transform_1, window_bounds = array<i64: 1, 32, 32>}, {transform_indices = @transform_2, window_bounds = array<i64: 1, 1, 32>}, {transform_indices = @transform_3, window_bounds = array<i64: 1, 32, 14>}, {transform_indices = @transform_4, window_bounds = array<i64: 1, 1, 128>}]} {
    %c0 = arith.constant 0 : index
    %c0_0 = arith.constant 0 : index
    %0 = vector.load %arg1[%c0, %c0_0] : memref<14x32xbf16, #tpu.memory_space<vmem>>, vector<14x32xbf16>
    %c0_1 = arith.constant 0 : index
    %c0_2 = arith.constant 0 : index
    %c0_3 = arith.constant 0 : index
    %1 = vector.load %arg2[%c0_1, %c0_2, %c0_3] : memref<1x32x32xbf16, #tpu.memory_space<vmem>>, vector<1x32x32xbf16>
    %2 = vector.shape_cast %1 : vector<1x32x32xbf16> to vector<32x32xbf16>
    %cst = arith.constant dense<0.000000e+00> : vector<14x32xf32>
    %3 = tpu.matmul %0, %2, %cst {dimension_numbers = #tpu.dot_dimension_numbers<[1], [0], [0], [1], [0, 0, 1, 1], [], []>} : vector<14x32xbf16>, vector<32x32xbf16>, vector<14x32xf32> -> vector<14x32xf32>
    %c0_4 = arith.constant 0 : index
    %c0_5 = arith.constant 0 : index
    %c0_6 = arith.constant 0 : index
    %4 = vector.load %arg3[%c0_4, %c0_5, %c0_6] : memref<1x1x32xf32, #tpu.memory_space<vmem>>, vector<1x1x32xf32>
    %5 = vector.shape_cast %4 : vector<1x1x32xf32> to vector<1x32xf32>
    %6 = vector.broadcast %5 : vector<1x32xf32> to vector<14x32xf32>
    %7 = arith.addf %3, %6 : vector<14x32xf32>
    %8 = arith.truncf %7 : vector<14x32xf32> to vector<14x32xbf16>
    %c0_7 = arith.constant 0 : index
    %c0_8 = arith.constant 0 : index
    %c0_9 = arith.constant 0 : index
    %9 = vector.load %arg4[%c0_7, %c0_8, %c0_9] : memref<1x32x14xbf16, #tpu.memory_space<vmem>>, vector<1x32x14xbf16>
    %10 = vector.shape_cast %9 : vector<1x32x14xbf16> to vector<32x14xbf16>
    %cst_10 = arith.constant dense<0.000000e+00> : vector<14x14xf32>
    %11 = tpu.matmul %8, %10, %cst_10 {dimension_numbers = #tpu.dot_dimension_numbers<[1], [0], [0], [1], [0, 0, 1, 1], [], []>} : vector<14x32xbf16>, vector<32x14xbf16>, vector<14x14xf32> -> vector<14x14xf32>
    %12 = tpu.iota {dimensions = array<i32: 0>} : vector<14x14xi32>
    %13 = tpu.iota {dimensions = array<i32: 1>} : vector<14x14xi32>
    %14 = arith.cmpi eq, %12, %13 : vector<14x14xi32>
    %15 = arith.cmpi slt, %13, %12 : vector<14x14xi32>
    %cst_11 = arith.constant dense<0xFF800000> : vector<14xf32>
    %16 = vector.multi_reduction <maximumf>, %11, %cst_11 [1] : vector<14x14xf32> to vector<14xf32>
    %17 = vector.shape_cast %16 : vector<14xf32> to vector<14x1xf32>
    %18 = vector.broadcast %17 : vector<14x1xf32> to vector<14x14xf32>
    %19 = arith.subf %11, %18 : vector<14x14xf32>
    %20 = math.exp %19 : vector<14x14xf32>
    %cst_12 = arith.constant dense<0.000000e+00> : vector<14xf32>
    %21 = vector.multi_reduction <add>, %20, %cst_12 [1] : vector<14x14xf32> to vector<14xf32>
    %22 = vector.shape_cast %21 : vector<14xf32> to vector<14x1xf32>
    %23 = math.log %22 : vector<14x1xf32>
    %cst_13 = arith.constant 0.000000e+00 : f32
    %24 = vector.broadcast %cst_13 : f32 to vector<14x14xf32>
    %25 = arith.select %14, %11, %24 : vector<14x14xi1>, vector<14x14xf32>
    %cst_14 = arith.constant dense<0.000000e+00> : vector<14xf32>
    %26 = vector.multi_reduction <add>, %25, %cst_14 [1] : vector<14x14xf32> to vector<14xf32>
    %27 = vector.shape_cast %26 : vector<14xf32> to vector<14x1xf32>
    %28 = arith.subf %27, %17 : vector<14x1xf32>
    %29 = arith.subf %28, %23 : vector<14x1xf32>
    %30 = vector.shape_cast %29 : vector<14x1xf32> to vector<1x14x1xf32>
    %cst_15 = arith.constant dense<0.000000e+00> : vector<1xf32>
    %31 = vector.multi_reduction <add>, %30, %cst_15 [1, 2] : vector<1x14x1xf32> to vector<1xf32>
    %32 = vector.shape_cast %31 : vector<1xf32> to vector<1x1x1xf32>
    %33 = vector.extract %32[0, 0, 0] : f32 from vector<1x1x1xf32>
    %34 = vector.broadcast %17 : vector<14x1xf32> to vector<14x14xf32>
    %35 = arith.cmpf oge, %11, %34 : vector<14x14xf32>
    %36 = arith.andi %15, %35 : vector<14x14xi1>
    %cst_16 = arith.constant 1.000000e+00 : f32
    %cst_17 = arith.constant 0.000000e+00 : f32
    %37 = vector.broadcast %cst_16 : f32 to vector<14x14xf32>
    %38 = vector.broadcast %cst_17 : f32 to vector<14x14xf32>
    %39 = arith.select %36, %37, %38 : vector<14x14xi1>, vector<14x14xf32>
    %cst_18 = arith.constant dense<0.000000e+00> : vector<14xf32>
    %40 = vector.multi_reduction <add>, %39, %cst_18 [1] : vector<14x14xf32> to vector<14xf32>
    %41 = vector.shape_cast %40 : vector<14xf32> to vector<14x1xf32>
    %42 = arith.cmpf oge, %27, %17 : vector<14x1xf32>
    %cst_19 = arith.constant 0.000000e+00 : f32
    %43 = vector.broadcast %cst_19 : f32 to vector<14x1xf32>
    %44 = arith.cmpf oeq, %41, %43 : vector<14x1xf32>
    %45 = arith.andi %42, %44 : vector<14x1xi1>
    %cst_20 = arith.constant 1.000000e+00 : f32
    %cst_21 = arith.constant 0.000000e+00 : f32
    %46 = vector.broadcast %cst_20 : f32 to vector<14x1xf32>
    %47 = vector.broadcast %cst_21 : f32 to vector<14x1xf32>
    %48 = arith.select %45, %46, %47 : vector<14x1xi1>, vector<14x1xf32>
    %49 = vector.shape_cast %48 : vector<14x1xf32> to vector<1x14x1xf32>
    %cst_22 = arith.constant dense<0.000000e+00> : vector<1xf32>
    %50 = vector.multi_reduction <add>, %49, %cst_22 [1, 2] : vector<1x14x1xf32> to vector<1xf32>
    %51 = vector.shape_cast %50 : vector<1xf32> to vector<1x1x1xf32>
    %52 = vector.extract %51[0, 0, 0] : f32 from vector<1x1x1xf32>
    %cst_23 = arith.constant 0.0714285746 : f32
    %53 = arith.mulf %52, %cst_23 : f32
    %54 = tpu.iota {dimensions = array<i32: 2>} : vector<1x1x128xi32>
    %c0_i32 = arith.constant 0 : i32
    %55 = vector.broadcast %c0_i32 : i32 to vector<1x1x128xi32>
    %56 = arith.cmpi eq, %54, %55 : vector<1x1x128xi32>
    %c1_i32 = arith.constant 1 : i32
    %57 = vector.broadcast %c1_i32 : i32 to vector<1x1x128xi32>
    %58 = arith.cmpi eq, %54, %57 : vector<1x1x128xi32>
    %cst_24 = arith.constant 0.000000e+00 : f32
    %59 = vector.broadcast %53 : f32 to vector<1x1x128xf32>
    %60 = vector.broadcast %cst_24 : f32 to vector<1x1x128xf32>
    %61 = arith.select %58, %59, %60 : vector<1x1x128xi1>, vector<1x1x128xf32>
    %62 = vector.broadcast %33 : f32 to vector<1x1x128xf32>
    %63 = arith.select %56, %62, %61 : vector<1x1x128xi1>, vector<1x1x128xf32>
    %c0_25 = arith.constant 0 : index
    %c0_26 = arith.constant 0 : index
    %c0_27 = arith.constant 0 : index
    %64 = vector.load %arg5[%c0_25, %c0_26, %c0_27] : memref<1x1x128xf32, #tpu.memory_space<vmem>>, vector<1x1x128xf32>
    tpu.vector_store %arg5[%c0_25, %c0_26, %c0_27], %63 {strides = array<i32>} : memref<1x1x128xf32, #tpu.memory_space<vmem>>, vector<1x1x128xf32>,
    return
  }
  func.func @transform_0(%arg0: i32) -> (i32, i32) {
    %c0_i32 = arith.constant 0 : i32
    %c0_i32_0 = arith.constant 0 : i32
    %c0_i32_1 = arith.constant 0 : i32
    return %c0_i32, %c0_i32_0 : i32, i32
  }
  func.func @transform_1(%arg0: i32) -> (i32, i32, i32) {
    %c0_i32 = arith.constant 0 : i32
    %c0_i32_0 = arith.constant 0 : i32
    %c0_i32_1 = arith.constant 0 : i32
    return %arg0, %c0_i32, %c0_i32_0 : i32, i32, i32
  }
  func.func @transform_2(%arg0: i32) -> (i32, i32, i32) {
    %c0_i32 = arith.constant 0 : i32
    %c0_i32_0 = arith.constant 0 : i32
    %c0_i32_1 = arith.constant 0 : i32
    return %arg0, %c0_i32, %c0_i32_0 : i32, i32, i32
  }
  func.func @transform_3(%arg0: i32) -> (i32, i32, i32) {
    %c0_i32 = arith.constant 0 : i32
    %c0_i32_0 = arith.constant 0 : i32
    %c0_i32_1 = arith.constant 0 : i32
    return %arg0, %c0_i32, %c0_i32_0 : i32, i32, i32
  }
  func.func @transform_4(%arg0: i32) -> (i32, i32, i32) {
    %c0_i32 = arith.constant 0 : i32
    %c0_i32_0 = arith.constant 0 : i32
    %c0_i32_1 = arith.constant 0 : i32
    return %arg0, %c0_i32, %c0_i32_0 : i32, i32, i32
  }
}

</mosaic_0001>

<llo_original>
// kernel: squeeze.9
$region0: #{squeeze.9}
  %s0 = inlined_call_operand.vmem [shape: bf16[2,1,7,32], index: 0, kind: input, shape index: {}]
  %s1 = inlined_call_operand.vmem [shape: bf16[1,14,32], index: 1, kind: output, shape index: {}]
  $region1: #{squeeze.9} parent=0
    #allocation0 [shape = 'u8[8192]{0}', space=vmem, size = 0x2000, scoped, tag = 'scoped mem for output reshape']
    #allocation1 [shape = 'u8[8192]{0}', space=vmem, size = 0x2000, scoped, tag = 'scoped mem for input reshape']
    %s3 = smul.u32 4, 2
    %s4 = sshllo.u32 0, %s3
    %s5 = scalar_lea.vmem %s0, 4
    %s6 = sshrl.u32 %s4, 1
    %s7 = sor.u32 %s4, %s6
    %s8 = sand.u32 %s7, 85
    %s9 = sshrl.u32 %s8, 1
    %s10 = sor.u32 %s8, %s9
    %s11 = sand.u32 51, %s10
    %s12 = sshrl.u32 %s11, 2
    %s13 = sor.u32 %s11, %s12
    %s14 = sand.u32 15, %s13
    %v15 = vld [vmem:[%s5] sm:%s14]
    %v16 = vunpack.c.l.bf16 %v15
    %v17 = vunpack.c.h.bf16 %v15
    %s18 = scalar_lea.vmem [#allocation1], 8
    %19 = vst [vmem:[%s18] sm:%s4] %v16
    %s20 = sshrl.u32 %s4, 1
    %s21 = sor.u32 %s4, %s20
    %s22 = sand.u32 %s21, 85
    %s23 = sshrl.u32 %s22, 1
    %s24 = sor.u32 %s22, %s23
    %s25 = sand.u32 51, %s24
    %s26 = sshrl.u32 %s25, 2
    %s27 = sor.u32 %s25, %s26
    %s28 = sand.u32 15, %s27
    %v29 = vld [vmem:[%s0] sm:%s28]
    %v30 = vunpack.c.l.bf16 %v29
    %v31 = vunpack.c.h.bf16 %v29
    %32 = vst [vmem:[#allocation1] sm:%s4] %v30
    %v33 = vld [vmem:[#allocation1] sm:$0x7f]
    %vm34 = vcmask 261120
    %35 = vst.msk [vmem:[#allocation0] sm:$0x7f] %vm34, %v33
    %s36 = scalar_lea.vmem [#allocation1], 8
    %v37 = vld [vmem:[%s36] sm:$0x7f]
    %vm38 = vcmask 261120
    %s39 = scalar_lea.vmem [#allocation0], 7
    %40 = vst.msk [vmem:[%s39] sm:$0x7f] %vm38, %v37
    %s42 = smul.u32 4, 2
    %s43 = sshllo.u32 0, %s42
    %s44 = sshrl.u32 %s42, 1
    %v45 = vld [vmem:[#allocation0] sm:%s43]
    %v46 = vpack.c.bf16 0.0, %v45
    %s47 = sshllo.u32 0, %s44
    %48 = vst [vmem:[%s1] sm:%s47] %v46
    %s49 = scalar_lea.vmem [#allocation0], 8
    %v50 = vld [vmem:[%s49] sm:%s43]
    %v51 = vpack.c.bf16 0.0, %v50
    %s52 = sshllo.u32 0, %s44
    %s53 = scalar_lea.vmem %s1, 4
    %54 = vst [vmem:[%s53] sm:%s52] %v51

// kernel: cpc_forward.4
$region0: #{cpc_forward.4}
  #allocation0 [shape = 'u32[]', space=smem, size = 0x4, offset = 0x4, fixed_abs, tag = 'smem constant byte address 0x4 - core index']
  #allocation1 [shape = 'u32[144,128]{1,0:T(1,128)}', space=vmem, size = 0x12000, scoped, tag = 'internal scratch']
  %s0 = inlined_call_operand.vmem [shape: bf16[16,128], index: 0, kind: input, shape index: {}]
  %s1 = inlined_call_operand.vmem [shape: bf16[128,16], index: 1, kind: input, shape index: {}]
  %s2 = inlined_call_operand.vmem [shape: f32[1,16], index: 2, kind: input, shape index: {}]
  %s3 = inlined_call_operand.vmem [shape: bf16[16,32], index: 3, kind: input, shape index: {}]
  %s4 = inlined_call_operand.vmem [shape: f32[1,32], index: 4, kind: input, shape index: {}]
  %s5 = inlined_call_operand.vmem [shape: bf16[16,32], index: 5, kind: output, shape index: {}]
  %s6 = sld [smem:[#allocation0]]
  $region30: #{cpc_forward.4} parent=0
    _
  %s8 = ssub.s32 1, %s6
  %s9 = scalar_select 0, %s8, %s6
  // Predicated region
  $region2: #{cpc_forward.4} parent=0 // pred_check
    _
  $region3: #{cpc_forward.4} parent=0 // pred_check_branch
    %11 = sbr.rel (0) target = $region5
  $region4: #{cpc_forward.4} parent=0 // pred_region
    _
  $region5: #{cpc_forward.4} parent=0 // pred_fallthru
    _
  // Predicated region
  $region6: #{cpc_forward.4} parent=0 // pred_check
    _
  $region7: #{cpc_forward.4} parent=0 // pred_check_branch
    %13 = sbr.rel (0) target = $region9
  $region8: #{cpc_forward.4} parent=0 // pred_region
    _
  $region9: #{cpc_forward.4} parent=0 // pred_fallthru
    _
  // Predicated region
  $region10: #{cpc_forward.4} parent=0 // pred_check
    _
  $region11: #{cpc_forward.4} parent=0 // pred_check_branch
    %15 = sbr.rel (0) target = $region13
  $region12: #{cpc_forward.4} parent=0 // pred_region
    _
  $region13: #{cpc_forward.4} parent=0 // pred_fallthru
    _
  // Predicated region
  $region14: #{cpc_forward.4} parent=0 // pred_check
    _
  $region15: #{cpc_forward.4} parent=0 // pred_check_branch
    %17 = sbr.rel (0) target = $region17
  $region16: #{cpc_forward.4} parent=0 // pred_region
    _
  $region17: #{cpc_forward.4} parent=0 // pred_fallthru
    _
  // Predicated region
  $region18: #{cpc_forward.4} parent=0 // pred_check
    _
  $region19: #{cpc_forward.4} parent=0 // pred_check_branch
    %19 = sbr.rel (0) target = $region21
  $region20: #{cpc_forward.4} parent=0 // pred_region
    _
  $region21: #{cpc_forward.4} parent=0 // pred_fallthru
    _
  %v21 = vld [vmem:[%s0] sm:$0xf]
  %v22 = vld [vmem:[%s0 + $0x4] sm:$0xf]
  %v23 = vld [vmem:[%s1] sm:$0xf]
  %v24 = vld [vmem:[%s1 + $0x4] sm:$0xf]
  %v25 = vld [vmem:[%s1 + $0x8] sm:$0xf]
  %v26 = vld [vmem:[%s1 + $0xc] sm:$0xf]
  %v27 = vld [vmem:[%s1 + $0x10] sm:$0xf]
  %v28 = vld [vmem:[%s1 + $0x14] sm:$0xf]
  %v29 = vld [vmem:[%s1 + $0x18] sm:$0xf]
  %v30 = vld [vmem:[%s1 + $0x1c] sm:$0xf]
  %v31 = vld [vmem:[%s1 + $0x20] sm:$0xf]
  %v32 = vld [vmem:[%s1 + $0x24] sm:$0xf]
  %v33 = vld [vmem:[%s1 + $0x28] sm:$0xf]
  %v34 = vld [vmem:[%s1 + $0x2c] sm:$0xf]
  %v35 = vld [vmem:[%s1 + $0x30] sm:$0xf]
  %v36 = vld [vmem:[%s1 + $0x34] sm:$0xf]
  %v37 = vld [vmem:[%s1 + $0x38] sm:$0xf]
  %v38 = vld [vmem:[%s1 + $0x3c] sm:$0xf]
  %v39 = vld [vmem:[%s2] sm:$0x1]
  %v41 = vlaneseq
  %v42 = vshrl.u32 %v41, 7
  %v43 = vsub.s32 0, %v42
  %v44 = vrot.slane %v39, %v43
  %v48 = vunpack.c.l.b16 %v21
  %v49 = vunpack.c.l.b16 %v22
  %v50 = vpack.c.b16 %v49, %v48
  %v68 = vunpack.c.l.b16 %v23
  %v69 = vunpack.c.l.b16 %v24
  %v70 = vunpack.c.l.b16 %v25
  %v71 = vunpack.c.l.b16 %v26
  %v72 = vunpack.c.l.b16 %v27
  %v73 = vunpack.c.l.b16 %v28
  %v74 = vunpack.c.l.b16 %v29
  %v75 = vunpack.c.l.b16 %v30
  %v76 = vunpack.c.l.b16 %v31
  %v77 = vunpack.c.l.b16 %v32
  %v78 = vunpack.c.l.b16 %v33
  %v79 = vunpack.c.l.b16 %v34
  %v80 = vunpack.c.l.b16 %v35
  %v81 = vunpack.c.l.b16 %v36
  %v82 = vunpack.c.l.b16 %v37
  %v83 = vunpack.c.l.b16 %v38
  %v84 = vpack.c.b16 %v69, %v68
  %v85 = vpack.c.b16 %v71, %v70
  %v86 = vpack.c.b16 %v73, %v72
  %v87 = vpack.c.b16 %v75, %v74
  %v88 = vpack.c.b16 %v77, %v76
  %v89 = vpack.c.b16 %v79, %v78
  %v90 = vpack.c.b16 %v81, %v80
  %v91 = vpack.c.b16 %v83, %v82
  %100 = vmatprep.subr.bf16.mxu0 0
  %101 = vmatpush1.bf16.msra.mxu0 %v84
  %102 = vmatprep.subr.bf16.mxu0 0
  %103 = vmatpush1.bf16.msra.mxu0 %v85
  %104 = vmatprep.subr.bf16.mxu0 0
  %105 = vmatpush1.bf16.msra.mxu0 %v86
  %106 = vmatprep.subr.bf16.mxu0 0
  %107 = vmatpush1.bf16.msra.mxu0 %v87
  %108 = vmatprep.subr.bf16.mxu0 0
  %109 = vmatpush1.bf16.msra.mxu0 %v88
  %110 = vmatprep.subr.bf16.mxu0 0
  %111 = vmatpush1.bf16.msra.mxu0 %v89
  %112 = vmatprep.subr.bf16.mxu0 0
  %113 = vmatpush1.bf16.msra.mxu0 %v90
  %114 = vmatprep.subr.bf16.mxu0 0
  %115 = vmatpush1.bf16.msra.mxu0 %v91
  %116 = vmatprep.subr.bf16.mxu0 0
  %117 = vmatpush1.bf16.msra.mxu0 0
  %118 = vmatprep.subr.bf16.mxu0 0
  %119 = vmatpush1.bf16.msra.mxu0 0
  %120 = vmatprep.subr.bf16.mxu0 0
  %121 = vmatpush1.bf16.msra.mxu0 0
  %122 = vmatprep.subr.bf16.mxu0 0
  %123 = vmatpush1.bf16.msra.mxu0 0
  %124 = vmatprep.subr.bf16.mxu0 0
  %125 = vmatpush1.bf16.msra.mxu0 0
  %126 = vmatprep.subr.bf16.mxu0 0
  %127 = vmatpush1.bf16.msra.mxu0 0
  %128 = vmatprep.subr.bf16.mxu0 0
  %129 = vmatpush1.bf16.msra.mxu0 0
  %130 = vmatprep.subr.bf16.mxu0 0
  %131 = vmatpush1.bf16.msra.mxu0 0
  %132 = vmatprep.mubr.bf16.mxu0 0
  %133 = vmatmul.mubr.bf16.gmra.mrb[0].mxu0 %v50
  %v134 = vpop.f32.mrb[0].mxu0
  %v135 = vadd.f32 %v44, %v134
  %v136 = vpop.f32.mrb[0].mxu0
  %v137 = vpop.f32.mrb[0].mxu0
  %v138 = vadd.f32 %v44, %v137
  %v139 = vpop.f32.mrb[0].mxu0
  %140 = vdwg.mxu0
  %v141 = vmax.f32 %v135, 0.0
  %v142 = vmax.f32 %v138, 0.0
  %v143 = vpack.c.bf16 %v142, %v141
  %v144 = vld [vmem:[%s3] sm:$0xf]
  %v145 = vld [vmem:[%s3 + $0x4] sm:$0xf]
  %v146 = vld [vmem:[%s4] sm:$0x1]
  %v148 = vlaneseq
  %v149 = vshrl.u32 %v148, 7
  %v150 = vsub.s32 0, %v149
  %v151 = vrot.slane %v146, %v150
  %v155 = vunpack.c.l.b16 %v144
  %v156 = vunpack.c.l.b16 %v145
  %v157 = vpack.c.b16 %v156, %v155
  %vm159 = vcmask 130048
  %v161 = vsel %vm159, %v143, 0
  %163 = vmatprep.subr.bf16.mxu0 0
  %164 = vmatpush1.bf16.msra.mxu0 %v157
  %165 = vmatprep.subr.bf16.mxu0 0
  %166 = vmatpush1.bf16.msra.mxu0 0
  %167 = vmatprep.subr.bf16.mxu0 0
  %168 = vmatpush1.bf16.msra.mxu0 0
  %169 = vmatprep.subr.bf16.mxu0 0
  %170 = vmatpush1.bf16.msra.mxu0 0
  %171 = vmatprep.subr.bf16.mxu0 0
  %172 = vmatpush1.bf16.msra.mxu0 0
  %173 = vmatprep.subr.bf16.mxu0 0
  %174 = vmatpush1.bf16.msra.mxu0 0
  %175 = vmatprep.subr.bf16.mxu0 0
  %176 = vmatpush1.bf16.msra.mxu0 0
  %177 = vmatprep.subr.bf16.mxu0 0
  %178 = vmatpush1.bf16.msra.mxu0 0
  %179 = vmatprep.subr.bf16.mxu0 0
  %180 = vmatpush1.bf16.msra.mxu0 0
  %181 = vmatprep.subr.bf16.mxu0 0
  %182 = vmatpush1.bf16.msra.mxu0 0
  %183 = vmatprep.subr.bf16.mxu0 0
  %184 = vmatpush1.bf16.msra.mxu0 0
  %185 = vmatprep.subr.bf16.mxu0 0
  %186 = vmatpush1.bf16.msra.mxu0 0
  %187 = vmatprep.subr.bf16.mxu0 0
  %188 = vmatpush1.bf16.msra.mxu0 0
  %189 = vmatprep.subr.bf16.mxu0 0
  %190 = vmatpush1.bf16.msra.mxu0 0
  %191 = vmatprep.subr.bf16.mxu0 0
  %192 = vmatpush1.bf16.msra.mxu0 0
  %193 = vmatprep.subr.bf16.mxu0 0
  %194 = vmatpush1.bf16.msra.mxu0 0
  %195 = vmatprep.mubr.bf16.mxu0 0
  %196 = vmatmul.mubr.bf16.gmra.mrb[0].mxu0 %v161
  %v197 = vpop.f32.mrb[0].mxu0
  %v198 = vadd.f32 %v151, %v197
  %v199 = vpop.f32.mrb[0].mxu0
  %v200 = vpop.f32.mrb[0].mxu0
  %v201 = vadd.f32 %v151, %v200
  %v202 = vpop.f32.mrb[0].mxu0
  %203 = vdwg.mxu0
  %v204 = vpack.c.bf16 %v201, %v198
  %v206 = vunpack.c.l.b16 %v204
  %v207 = vunpack.c.h.b16 %v204
  %v208 = vpack.c.b16 %v206, %v206
  %v209 = vpack.c.b16 %v207, %v207
  %vm212 = vcmask 257024
  %213 = vst.msk [vmem:[%s5] sm:$0xf] %vm212, %v208
  %214 = vst.msk [vmem:[%s5 + $0x4] sm:$0xf] %vm212, %v209
  // Predicated region
  $region22: #{cpc_forward.4} parent=0 // pred_check
    _
  $region23: #{cpc_forward.4} parent=0 // pred_check_branch
    %216 = sbr.rel (0) target = $region25
  $region24: #{cpc_forward.4} parent=0 // pred_region
    _
  $region25: #{cpc_forward.4} parent=0 // pred_fallthru
    _
  // Predicated region
  $region26: #{cpc_forward.4} parent=0 // pred_check
    _
  $region27: #{cpc_forward.4} parent=0 // pred_check_branch
    %218 = sbr.rel (0) target = $region29
  $region28: #{cpc_forward.4} parent=0 // pred_region
    _
  $region29: #{cpc_forward.4} parent=0 // pred_fallthru
    _

// kernel: cpc_forward.3
$region0: #{cpc_forward.3}
  #allocation0 [shape = 'u32[]', space=smem, size = 0x4, offset = 0x4, fixed_abs, tag = 'smem constant byte address 0x4 - core index']
  #allocation1 [shape = 'u32[144,128]{1,0:T(1,128)}', space=vmem, size = 0x12000, scoped, tag = 'internal scratch']
  %s0 = inlined_call_operand.vmem [shape: bf16[128,192], index: 0, kind: input, shape index: {}]
  %s1 = inlined_call_operand.vmem [shape: bf16[192,32], index: 1, kind: input, shape index: {}]
  %s2 = inlined_call_operand.vmem [shape: f32[1,32], index: 2, kind: input, shape index: {}]
  %s3 = inlined_call_operand.vmem [shape: bf16[128,32], index: 3, kind: output, shape index: {}]
  %s4 = sld [smem:[#allocation0]]
  $region45: #{cpc_forward.3} parent=0
    _
  %s6 = ssub.s32 1, %s4
  %s7 = scalar_select 0, %s6, %s4
  loop: start=0, step=1, limit=4
  $region2: #{cpc_forward.3} parent=0 // loop_pre_header
    _
  $region3: #{cpc_forward.3} parent=0 // loop_header
    %s9 = sphi 0, %s13
    %p10 = scmp.ge.s32.totalorder %s9, 4
    %s19 = sphi 0, %s21
    %s22 = sphi 0, %s19
    %s23 = sphi 0, %s22
    %s39 = sphi 0, %s23
    %s43 = sphi 0, %s43
    %s45 = sphi 0, %s43
    %s46 = sphi 0, %s45
    %s60 = sphi 0, %s46
    %s64 = sphi 0, %s64
    %s66 = sphi 0, %s64
    %s67 = sphi 0, %s66
    %s81 = sphi 0, %s67
    %s87 = sphi 0, %s89
    %s90 = sphi 0, %s87
    %s91 = sphi 0, %s90
    %s107 = sphi 0, %s91
  $region4: #{cpc_forward.3} parent=0 // loop_header_branch
    %12 = sbr.rel (%p10) target = $region8
  $region5: #{cpc_forward.3} parent=0 // loop_body
    %s14 = ssub.s32 %s9, 1
    %s15 = ssub.s32 %s9, 2
    %s16 = sadd.s32 %s9, 1
    %s17 = ssub.s32 %s9, %s16
    %p18 = scmp.eq.s32.totalorder %s17, 0
    %s20 = sadd.s32 %s19, 1
    %s21 = scalar_select %p18, %s19, %s20
    %p24 = pneg %p18
    %p25 = scmp.eq.s32.totalorder %s9, 1
    %p26 = por %p24, %p25
    %p27 = scmp.ne.s32.totalorder %s19, %s22
    %p28 = scmp.eq.s32.totalorder %s9, 0
    %p29 = por %p27, %p28
    %p30 = scmp.ne.s32.totalorder %s19, %s22
    %p31 = scmp.eq.s32.totalorder %s14, 1
    %p32 = por %p30, %p31
    %p33 = scmp.ne.s32.totalorder %s22, %s23
    %p34 = scmp.eq.s32.totalorder %s14, 0
    %p35 = por %p33, %p34
    %p36 = scmp.ne.s32.totalorder %s22, %s23
    %p37 = scmp.eq.s32.totalorder %s15, 1
    %p38 = por %p36, %p37
    %p40 = scmp.ne.s32.totalorder %s23, %s39
    %p41 = scmp.eq.s32.totalorder %s15, 0
    %p42 = por %p40, %p41
    %s44 = sadd.s32 %s43, 1
    %p47 = scmp.eq.s32.totalorder %s9, 1
    %p48 = scmp.ne.s32.totalorder %s43, %s45
    %p49 = scmp.eq.s32.totalorder %s9, 0
    %p50 = por %p48, %p49
    %p51 = scmp.ne.s32.totalorder %s43, %s45
    %p52 = scmp.eq.s32.totalorder %s14, 1
    %p53 = por %p51, %p52
    %p54 = scmp.ne.s32.totalorder %s45, %s46
    %p55 = scmp.eq.s32.totalorder %s14, 0
    %p56 = por %p54, %p55
    %p57 = scmp.ne.s32.totalorder %s45, %s46
    %p58 = scmp.eq.s32.totalorder %s15, 1
    %p59 = por %p57, %p58
    %p61 = scmp.ne.s32.totalorder %s46, %s60
    %p62 = scmp.eq.s32.totalorder %s15, 0
    %p63 = por %p61, %p62
    %s65 = sadd.s32 %s64, 1
    %p68 = scmp.eq.s32.totalorder %s9, 1
    %p69 = scmp.ne.s32.totalorder %s64, %s66
    %p70 = scmp.eq.s32.totalorder %s9, 0
    %p71 = por %p69, %p70
    %p72 = scmp.ne.s32.totalorder %s64, %s66
    %p73 = scmp.eq.s32.totalorder %s14, 1
    %p74 = por %p72, %p73
    %p75 = scmp.ne.s32.totalorder %s66, %s67
    %p76 = scmp.eq.s32.totalorder %s14, 0
    %p77 = por %p75, %p76
    %p78 = scmp.ne.s32.totalorder %s66, %s67
    %p79 = scmp.eq.s32.totalorder %s15, 1
    %p80 = por %p78, %p79
    %p82 = scmp.ne.s32.totalorder %s67, %s81
    %p83 = scmp.eq.s32.totalorder %s15, 0
    %p84 = por %p82, %p83
    %s85 = ssub.s32 %s9, %s16
    %p86 = scmp.eq.s32.totalorder %s85, 0
    %s88 = sadd.s32 %s87, 1
    %s89 = scalar_select %p86, %s87, %s88
    %p92 = pneg %p86
    %p93 = scmp.eq.s32.totalorder %s9, 1
    %p94 = por %p92, %p93
    %p95 = scmp.ne.s32.totalorder %s87, %s90
    %p96 = scmp.eq.s32.totalorder %s9, 0
    %p97 = por %p95, %p96
    %p98 = scmp.ne.s32.totalorder %s87, %s90
    %p99 = scmp.eq.s32.totalorder %s14, 1
    %p100 = por %p98, %p99
    %p101 = scmp.ne.s32.totalorder %s90, %s91
    %p102 = scmp.eq.s32.totalorder %s14, 0
    %p103 = por %p101, %p102
    %p104 = scmp.ne.s32.totalorder %s90, %s91
    %p105 = scmp.eq.s32.totalorder %s15, 1
    %p106 = por %p104, %p105
    %p108 = scmp.ne.s32.totalorder %s91, %s107
    %p109 = scmp.eq.s32.totalorder %s15, 0
    %p110 = por %p108, %p109
    %p111 = scmp.le.s32.totalorder 1, %s9
    %p112 = scmp.lt.s32.totalorder %s9, 3
    %p113 = pnand %p111, %p112
    %p114 = pneg %p113
    // Predicated region
    $region9: #{cpc_forward.3} parent=5 // pred_check
      _
    $region10: #{cpc_forward.3} parent=5 // pred_check_branch
      %116 = sbr.rel (%p113) target = $region12
    $region11: #{cpc_forward.3} parent=5 // pred_region
      %s117 = ssub.s32 %s9, 1
      // Predicated region
      $region13: #{cpc_forward.3} parent=11 // pred_check
        %p118 = pneg %p56
      $region14: #{cpc_forward.3} parent=11 // pred_check_branch
        %120 = sbr.rel (%p118) target = $region16
      $region15: #{cpc_forward.3} parent=11 // pred_region
        _
      $region16: #{cpc_forward.3} parent=11 // pred_fallthru
        _
      // Predicated region
      $region17: #{cpc_forward.3} parent=11 // pred_check
        %p121 = pneg %p77
      $region18: #{cpc_forward.3} parent=11 // pred_check_branch
        %123 = sbr.rel (%p121) target = $region20
      $region19: #{cpc_forward.3} parent=11 // pred_region
        _
      $region20: #{cpc_forward.3} parent=11 // pred_fallthru
        _
    $region12: #{cpc_forward.3} parent=5 // pred_fallthru
      _
    %p124 = scmp.lt.s32.totalorder %s9, 2
    // Predicated region
    $region21: #{cpc_forward.3} parent=5 // pred_check
      %p125 = pneg %p124
    $region22: #{cpc_forward.3} parent=5 // pred_check_branch
      %127 = sbr.rel (%p125) target = $region24
    $region23: #{cpc_forward.3} parent=5 // pred_region
      // Predicated region
      $region25: #{cpc_forward.3} parent=23 // pred_check
        %p128 = pneg %p29
      $region26: #{cpc_forward.3} parent=23 // pred_check_branch
        %130 = sbr.rel (%p128) target = $region28
      $region27: #{cpc_forward.3} parent=23 // pred_region
        %s131 = smul.u32 8, %s9
        %p132 = scmp.lt.s32.totalorder %s131, 15
        %s133 = scalar_select %p132, %s131, 15
        %s134 = smul.addr %s133, 2
        %s135 = smul.addr %s134, 4
        %s136 = scalar_lea.vmem %s0, %s135
        %s137 = smul.u32 8, %s9
      $region28: #{cpc_forward.3} parent=23 // pred_fallthru
        _
    $region24: #{cpc_forward.3} parent=5 // pred_fallthru
      _
    %p138 = scmp.le.s32.totalorder 1, %s9
    %p139 = scmp.lt.s32.totalorder %s9, 3
    %p140 = pnand %p138, %p139
    %p141 = pneg %p140
    // Predicated region
    $region29: #{cpc_forward.3} parent=5 // pred_check
      _
    $region30: #{cpc_forward.3} parent=5 // pred_check_branch
      %143 = sbr.rel (%p140) target = $region32
    $region31: #{cpc_forward.3} parent=5 // pred_region
      %s144 = ssub.s32 %s9, 1
      %s145 = smul.u32 8, %s14
      %p146 = scmp.lt.s32.totalorder %s145, 15
      %s147 = scalar_select %p146, %s145, 15
      %s148 = smul.addr %s147, 2
      %s149 = smul.addr %s148, 4
      %s150 = scalar_lea.vmem %s0, %s149
      %p151 = pneg %p35
      %p152 = pneg %p32
      %p153 = pneg %p56
      %p154 = pneg %p53
      %p155 = pneg %p77
      %p156 = pneg %p74
      %p157 = pneg %p103
      %p158 = pneg %p100
      %s159 = smul.u32 8, %s14
      %p160 = scmp.lt.s32.totalorder %s159, 15
      %s161 = scalar_select %p160, %s159, 15
      %s162 = smul.addr %s161, 4
      %s163 = scalar_lea.vmem %s3, %s162
      %s164 = smul.u32 8, %s14
      %p165 = scmp.lt.s32.totalorder %s164, 15
      %s166 = scalar_select %p165, %s164, 15
      %s167 = smul.addr %s166, 2
      %s168 = smul.addr %s167, 4
      %s169 = scalar_lea.vmem %s0, %s168
      %s170 = smul.u32 8, %s14
      %s171 = smul.u32 8, %s14
      %p172 = scmp.lt.s32.totalorder %s171, 15
      %s173 = scalar_select %p172, %s171, 15
      %s174 = smul.addr %s173, 4
      %s175 = scalar_lea.vmem %s3, %s174
      %s176 = smul.u32 8, %s14
      %v178 = vld [vmem:[%s169] sm:$0xff]
      %v179 = vld [vmem:[%s169 + $0x8] sm:$0xff]
      %v180 = vld [vmem:[%s169 + $0x10] sm:$0xff]
      %v181 = vld [vmem:[%s169 + $0x18] sm:$0xff]
      %v182 = vld [vmem:[%s169 + $0x20] sm:$0xff]
      %v183 = vld [vmem:[%s169 + $0x28] sm:$0xff]
      %v184 = vld [vmem:[%s169 + $0x30] sm:$0xff]
      %v185 = vld [vmem:[%s169 + $0x38] sm:$0xff]
      %v186 = vld [vmem:[%s1] sm:$0xf]
      %v187 = vld [vmem:[%s1 + $0x4] sm:$0xf]
      %v188 = vld [vmem:[%s1 + $0x8] sm:$0xf]
      %v189 = vld [vmem:[%s1 + $0xc] sm:$0xf]
      %v190 = vld [vmem:[%s1 + $0x10] sm:$0xf]
      %v191 = vld [vmem:[%s1 + $0x14] sm:$0xf]
      %v192 = vld [vmem:[%s1 + $0x18] sm:$0xf]
      %v193 = vld [vmem:[%s1 + $0x1c] sm:$0xf]
      %v194 = vld [vmem:[%s1 + $0x20] sm:$0xf]
      %v195 = vld [vmem:[%s1 + $0x24] sm:$0xf]
      %v196 = vld [vmem:[%s1 + $0x28] sm:$0xf]
      %v197 = vld [vmem:[%s1 + $0x2c] sm:$0xf]
      %v198 = vld [vmem:[%s1 + $0x30] sm:$0xf]
      %v199 = vld [vmem:[%s1 + $0x34] sm:$0xf]
      %v200 = vld [vmem:[%s1 + $0x38] sm:$0xf]
      %v201 = vld [vmem:[%s1 + $0x3c] sm:$0xf]
      %v202 = vld [vmem:[%s1 + $0x40] sm:$0xf]
      %v203 = vld [vmem:[%s1 + $0x44] sm:$0xf]
      %v204 = vld [vmem:[%s1 + $0x48] sm:$0xf]
      %v205 = vld [vmem:[%s1 + $0x4c] sm:$0xf]
      %v206 = vld [vmem:[%s1 + $0x50] sm:$0xf]
      %v207 = vld [vmem:[%s1 + $0x54] sm:$0xf]
      %v208 = vld [vmem:[%s1 + $0x58] sm:$0xf]
      %v209 = vld [vmem:[%s1 + $0x5c] sm:$0xf]
      %v210 = vld [vmem:[%s2] sm:$0x1]
      %v212 = vlaneseq
      %v213 = vshrl.u32 %v212, 7
      %v214 = vsub.s32 0, %v213
      %v215 = vrot.slane %v210, %v214
      %v225 = vunpack.c.l.b16 %v178
      %v226 = vunpack.c.h.b16 %v178
      %v227 = vunpack.c.l.b16 %v179
      %v228 = vunpack.c.h.b16 %v179
      %v229 = vunpack.c.l.b16 %v180
      %v230 = vunpack.c.h.b16 %v180
      %v231 = vunpack.c.l.b16 %v181
      %v232 = vunpack.c.h.b16 %v181
      %v233 = vunpack.c.l.b16 %v182
      %v234 = vunpack.c.h.b16 %v182
      %v235 = vunpack.c.l.b16 %v183
      %v236 = vunpack.c.h.b16 %v183
      %v237 = vunpack.c.l.b16 %v184
      %v238 = vunpack.c.h.b16 %v184
      %v239 = vunpack.c.l.b16 %v185
      %v240 = vunpack.c.h.b16 %v185
      %v241 = vpack.c.b16 %v227, %v225
      %v242 = vpack.c.b16 %v228, %v226
      %v243 = vpack.c.b16 %v231, %v229
      %v244 = vpack.c.b16 %v232, %v230
      %v245 = vpack.c.b16 %v235, %v233
      %v246 = vpack.c.b16 %v236, %v234
      %v247 = vpack.c.b16 %v239, %v237
      %v248 = vpack.c.b16 %v240, %v238
      %v277 = vunpack.c.l.b16 %v186
      %v278 = vunpack.c.l.b16 %v187
      %v279 = vunpack.c.l.b16 %v188
      %v280 = vunpack.c.l.b16 %v189
      %v281 = vunpack.c.l.b16 %v190
      %v282 = vunpack.c.l.b16 %v191
      %v283 = vunpack.c.l.b16 %v192
      %v284 = vunpack.c.l.b16 %v193
      %v285 = vunpack.c.l.b16 %v194
      %v286 = vunpack.c.l.b16 %v195
      %v287 = vunpack.c.l.b16 %v196
      %v288 = vunpack.c.l.b16 %v197
      %v289 = vunpack.c.l.b16 %v198
      %v290 = vunpack.c.l.b16 %v199
      %v291 = vunpack.c.l.b16 %v200
      %v292 = vunpack.c.l.b16 %v201
      %v293 = vunpack.c.l.b16 %v202
      %v294 = vunpack.c.l.b16 %v203
      %v295 = vunpack.c.l.b16 %v204
      %v296 = vunpack.c.l.b16 %v205
      %v297 = vunpack.c.l.b16 %v206
      %v298 = vunpack.c.l.b16 %v207
      %v299 = vunpack.c.l.b16 %v208
      %v300 = vunpack.c.l.b16 %v209
      %v301 = vpack.c.b16 %v278, %v277
      %v302 = vpack.c.b16 %v280, %v279
      %v303 = vpack.c.b16 %v282, %v281
      %v304 = vpack.c.b16 %v284, %v283
      %v305 = vpack.c.b16 %v286, %v285
      %v306 = vpack.c.b16 %v288, %v287
      %v307 = vpack.c.b16 %v290, %v289
      %v308 = vpack.c.b16 %v292, %v291
      %v309 = vpack.c.b16 %v294, %v293
      %v310 = vpack.c.b16 %v296, %v295
      %v311 = vpack.c.b16 %v298, %v297
      %v312 = vpack.c.b16 %v300, %v299
      %vm325 = vcmask 523264
      %v327 = vsel %vm325, %v242, 0
      %v330 = vsel %vm325, %v244, 0
      %v333 = vsel %vm325, %v246, 0
      %v336 = vsel %vm325, %v248, 0
      %338 = vmatprep.subr.bf16.mxu0 0
      %339 = vmatpush1.bf16.msra.mxu0 %v301
      %340 = vmatprep.subr.bf16.mxu0 0
      %341 = vmatpush1.bf16.msra.mxu0 %v302
      %342 = vmatprep.subr.bf16.mxu0 0
      %343 = vmatpush1.bf16.msra.mxu0 %v303
      %344 = vmatprep.subr.bf16.mxu0 0
      %345 = vmatpush1.bf16.msra.mxu0 %v304
      %346 = vmatprep.subr.bf16.mxu0 0
      %347 = vmatpush1.bf16.msra.mxu0 %v305
      %348 = vmatprep.subr.bf16.mxu0 0
      %349 = vmatpush1.bf16.msra.mxu0 %v306
      %350 = vmatprep.subr.bf16.mxu0 0
      %351 = vmatpush1.bf16.msra.mxu0 %v307
      %352 = vmatprep.subr.bf16.mxu0 0
      %353 = vmatpush1.bf16.msra.mxu0 %v308
      %354 = vmatprep.subr.bf16.mxu0 0
      %355 = vmatpush1.bf16.msra.mxu0 %v309
      %356 = vmatprep.subr.bf16.mxu0 0
      %357 = vmatpush1.bf16.msra.mxu0 %v310
      %358 = vmatprep.subr.bf16.mxu0 0
      %359 = vmatpush1.bf16.msra.mxu0 %v311
      %360 = vmatprep.subr.bf16.mxu0 0
      %361 = vmatpush1.bf16.msra.mxu0 %v312
      %362 = vmatprep.subr.bf16.mxu0 0
      %363 = vmatpush1.bf16.msra.mxu0 0
      %364 = vmatprep.subr.bf16.mxu0 0
      %365 = vmatpush1.bf16.msra.mxu0 0
      %366 = vmatprep.subr.bf16.mxu0 0
      %367 = vmatpush1.bf16.msra.mxu0 0
      %368 = vmatprep.subr.bf16.mxu0 0
      %369 = vmatpush1.bf16.msra.mxu0 0
      %370 = vmatprep.mubr.bf16.mxu0 %v327
      %371 = vmatmul.mubr.bf16.gmra.mrb[0].mxu0 %v241
      %v372 = vpop.f32.mrb[0].mxu0
      %v373 = vadd.f32 %v215, %v372
      %v374 = vpop.f32.mrb[0].mxu0
      %v375 = vpop.f32.mrb[0].mxu0
      %v376 = vadd.f32 %v215, %v375
      %v377 = vpop.f32.mrb[0].mxu0
      %378 = vmatprep.mubr.bf16.mxu0 %v330
      %379 = vmatmul.mubr.bf16.gmra.mrb[0].mxu0 %v243
      %v380 = vpop.f32.mrb[0].mxu0
      %v381 = vadd.f32 %v215, %v380
      %v382 = vpop.f32.mrb[0].mxu0
      %v383 = vpop.f32.mrb[0].mxu0
      %v384 = vadd.f32 %v215, %v383
      %v385 = vpop.f32.mrb[0].mxu0
      %386 = vmatprep.mubr.bf16.mxu0 %v333
      %387 = vmatmul.mubr.bf16.gmra.mrb[0].mxu0 %v245
      %v388 = vpop.f32.mrb[0].mxu0
      %v389 = vadd.f32 %v215, %v388
      %v390 = vpop.f32.mrb[0].mxu0
      %v391 = vpop.f32.mrb[0].mxu0
      %v392 = vadd.f32 %v215, %v391
      %v393 = vpop.f32.mrb[0].mxu0
      %394 = vmatprep.mubr.bf16.mxu0 %v336
      %395 = vmatmul.mubr.bf16.gmra.mrb[0].mxu0 %v247
      %v396 = vpop.f32.mrb[0].mxu0
      %v397 = vadd.f32 %v215, %v396
      %v398 = vpop.f32.mrb[0].mxu0
      %v399 = vpop.f32.mrb[0].mxu0
      %v400 = vadd.f32 %v215, %v399
      %v401 = vpop.f32.mrb[0].mxu0
      %402 = vdwg.mxu0
      %v403 = vmax.f32 %v373, 0.0
      %v404 = vmax.f32 %v376, 0.0
      %v405 = vmax.f32 %v381, 0.0
      %v406 = vmax.f32 %v384, 0.0
      %v407 = vmax.f32 %v389, 0.0
      %v408 = vmax.f32 %v392, 0.0
      %v409 = vmax.f32 %v397, 0.0
      %v410 = vmax.f32 %v400, 0.0
      %v411 = vpack.c.bf16 %v404, %v403
      %v412 = vpack.c.bf16 %v406, %v405
      %v413 = vpack.c.bf16 %v408, %v407
      %v414 = vpack.c.bf16 %v410, %v409
      %v419 = vunpack.c.l.b16 %v411
      %v420 = vunpack.c.h.b16 %v411
      %v421 = vunpack.c.l.b16 %v412
      %v422 = vunpack.c.h.b16 %v412
      %v423 = vunpack.c.l.b16 %v413
      %v424 = vunpack.c.h.b16 %v413
      %v425 = vunpack.c.l.b16 %v414
      %v426 = vunpack.c.h.b16 %v414
      %v427 = vpack.c.b16 %v419, %v419
      %v428 = vpack.c.b16 %v420, %v420
      %v429 = vpack.c.b16 %v421, %v421
      %v430 = vpack.c.b16 %v422, %v422
      %v431 = vpack.c.b16 %v423, %v423
      %v432 = vpack.c.b16 %v424, %v424
      %v433 = vpack.c.b16 %v425, %v425
      %v434 = vpack.c.b16 %v426, %v426
      %vm443 = vcmask 257024
      %444 = vst.msk [vmem:[%s175] sm:$0xf] %vm443, %v427
      %445 = vst.msk [vmem:[%s175 + $0x4] sm:$0xf] %vm443, %v428
      %446 = vst.msk [vmem:[%s175 + $0x8] sm:$0xf] %vm443, %v429
      %447 = vst.msk [vmem:[%s175 + $0xc] sm:$0xf] %vm443, %v430
      %448 = vst.msk [vmem:[%s175 + $0x10] sm:$0xf] %vm443, %v431
      %449 = vst.msk [vmem:[%s175 + $0x14] sm:$0xf] %vm443, %v432
      %450 = vst.msk [vmem:[%s175 + $0x18] sm:$0xf] %vm443, %v433
      %451 = vst.msk [vmem:[%s175 + $0x1c] sm:$0xf] %vm443, %v434
      %s452 = smul.u32 8, %s14
      %p453 = scmp.lt.s32.totalorder %s452, 15
      %s454 = scalar_select %p453, %s452, 15
      %s455 = smul.addr %s454, 4
      %s456 = scalar_lea.vmem %s3, %s455
      // Predicated region
      $region33: #{cpc_forward.3} parent=31 // pred_check
        %p457 = pneg %p100
      $region34: #{cpc_forward.3} parent=31 // pred_check_branch
        %459 = sbr.rel (%p457) target = $region36
      $region35: #{cpc_forward.3} parent=31 // pred_region
        %s460 = smul.u32 8, %s14
      $region36: #{cpc_forward.3} parent=31 // pred_fallthru
        _
    $region32: #{cpc_forward.3} parent=5 // pred_fallthru
      _
    %p461 = scmp.le.s32.totalorder 2, %s9
    // Predicated region
    $region37: #{cpc_forward.3} parent=5 // pred_check
      %p462 = pneg %p461
    $region38: #{cpc_forward.3} parent=5 // pred_check_branch
      %464 = sbr.rel (%p462) target = $region40
    $region39: #{cpc_forward.3} parent=5 // pred_region
      %s465 = ssub.s32 %s9, 2
      // Predicated region
      $region41: #{cpc_forward.3} parent=39 // pred_check
        %p466 = pneg %p106
      $region42: #{cpc_forward.3} parent=39 // pred_check_branch
        %468 = sbr.rel (%p466) target = $region44
      $region43: #{cpc_forward.3} parent=39 // pred_region
        %s469 = smul.u32 8, %s15
        %p470 = scmp.lt.s32.totalorder %s469, 15
        %s471 = scalar_select %p470, %s469, 15
        %s472 = smul.addr %s471, 4
        %s473 = scalar_lea.vmem %s3, %s472
      $region44: #{cpc_forward.3} parent=39 // pred_fallthru
        _
    $region40: #{cpc_forward.3} parent=5 // pred_fallthru
      _
  $region6: #{cpc_forward.3} parent=0 // loop_footer
    %s13 = sadd.s32 1, %s9
  $region7: #{cpc_forward.3} parent=0 // loop_footer_branch
    %8 = sbr.rel target = $region3
  $region8: #{cpc_forward.3} parent=0 // loop_exit
    _

// kernel: cpc_forward.5
$region0: #{cpc_forward.5}
  #allocation0 [shape = 'u32[]', space=smem, size = 0x4, offset = 0x4, fixed_abs, tag = 'smem constant byte address 0x4 - core index']
  #allocation1 [shape = 'u32[144,128]{1,0:T(1,128)}', space=vmem, size = 0x12000, scoped, tag = 'internal scratch']
  %s0 = inlined_call_operand.vmem [shape: bf16[14,32], index: 0, kind: input, shape index: {}]
  %s1 = inlined_call_operand.vmem [shape: bf16[3,32,32], index: 1, kind: input, shape index: {}]
  %s2 = inlined_call_operand.vmem [shape: f32[3,1,32], index: 2, kind: input, shape index: {}]
  %s3 = inlined_call_operand.vmem [shape: bf16[3,32,14], index: 3, kind: input, shape index: {}]
  %s4 = inlined_call_operand.vmem [shape: f32[3,1,128], index: 4, kind: output, shape index: {}]
  %s5 = sld [smem:[#allocation0]]
  $region49: #{cpc_forward.5} parent=0
    _
  %s7 = ssub.s32 1, %s5
  %s8 = scalar_select 0, %s7, %s5
  loop: start=0, step=1, limit=5
  $region2: #{cpc_forward.5} parent=0 // loop_pre_header
    _
  $region3: #{cpc_forward.5} parent=0 // loop_header
    %s10 = sphi 0, %s14
    %p11 = scmp.ge.s32.totalorder %s10, 5
    %s18 = sphi 0, %s18
    %s20 = sphi 0, %s18
    %s21 = sphi 0, %s20
    %s35 = sphi 0, %s21
    %s41 = sphi 0, %s43
    %s44 = sphi 0, %s41
    %s45 = sphi 0, %s44
    %s61 = sphi 0, %s45
    %s67 = sphi 0, %s69
    %s70 = sphi 0, %s67
    %s71 = sphi 0, %s70
    %s87 = sphi 0, %s71
    %s93 = sphi 0, %s95
    %s96 = sphi 0, %s93
    %s97 = sphi 0, %s96
    %s113 = sphi 0, %s97
    %s119 = sphi 0, %s121
    %s122 = sphi 0, %s119
    %s123 = sphi 0, %s122
    %s139 = sphi 0, %s123
  $region4: #{cpc_forward.5} parent=0 // loop_header_branch
    %13 = sbr.rel (%p11) target = $region8
  $region5: #{cpc_forward.5} parent=0 // loop_body
    %s15 = ssub.s32 %s10, 1
    %s16 = ssub.s32 %s10, 2
    %s17 = sadd.s32 %s10, 1
    %s19 = sadd.s32 %s18, 1
    %p22 = scmp.eq.s32.totalorder %s10, 2
    %p23 = scmp.ne.s32.totalorder %s18, %s20
    %p24 = scmp.eq.s32.totalorder %s10, 0
    %p25 = por %p23, %p24
    %p26 = scmp.ne.s32.totalorder %s18, %s20
    %p27 = scmp.eq.s32.totalorder %s15, 2
    %p28 = por %p26, %p27
    %p29 = scmp.ne.s32.totalorder %s20, %s21
    %p30 = scmp.eq.s32.totalorder %s15, 0
    %p31 = por %p29, %p30
    %p32 = scmp.ne.s32.totalorder %s20, %s21
    %p33 = scmp.eq.s32.totalorder %s16, 2
    %p34 = por %p32, %p33
    %p36 = scmp.ne.s32.totalorder %s21, %s35
    %p37 = scmp.eq.s32.totalorder %s16, 0
    %p38 = por %p36, %p37
    %s39 = ssub.s32 %s10, %s17
    %p40 = scmp.eq.s32.totalorder %s39, 0
    %s42 = sadd.s32 %s41, 1
    %s43 = scalar_select %p40, %s41, %s42
    %p46 = pneg %p40
    %p47 = scmp.eq.s32.totalorder %s10, 2
    %p48 = por %p46, %p47
    %p49 = scmp.ne.s32.totalorder %s41, %s44
    %p50 = scmp.eq.s32.totalorder %s10, 0
    %p51 = por %p49, %p50
    %p52 = scmp.ne.s32.totalorder %s41, %s44
    %p53 = scmp.eq.s32.totalorder %s15, 2
    %p54 = por %p52, %p53
    %p55 = scmp.ne.s32.totalorder %s44, %s45
    %p56 = scmp.eq.s32.totalorder %s15, 0
    %p57 = por %p55, %p56
    %p58 = scmp.ne.s32.totalorder %s44, %s45
    %p59 = scmp.eq.s32.totalorder %s16, 2
    %p60 = por %p58, %p59
    %p62 = scmp.ne.s32.totalorder %s45, %s61
    %p63 = scmp.eq.s32.totalorder %s16, 0
    %p64 = por %p62, %p63
    %s65 = ssub.s32 %s10, %s17
    %p66 = scmp.eq.s32.totalorder %s65, 0
    %s68 = sadd.s32 %s67, 1
    %s69 = scalar_select %p66, %s67, %s68
    %p72 = pneg %p66
    %p73 = scmp.eq.s32.totalorder %s10, 2
    %p74 = por %p72, %p73
    %p75 = scmp.ne.s32.totalorder %s67, %s70
    %p76 = scmp.eq.s32.totalorder %s10, 0
    %p77 = por %p75, %p76
    %p78 = scmp.ne.s32.totalorder %s67, %s70
    %p79 = scmp.eq.s32.totalorder %s15, 2
    %p80 = por %p78, %p79
    %p81 = scmp.ne.s32.totalorder %s70, %s71
    %p82 = scmp.eq.s32.totalorder %s15, 0
    %p83 = por %p81, %p82
    %p84 = scmp.ne.s32.totalorder %s70, %s71
    %p85 = scmp.eq.s32.totalorder %s16, 2
    %p86 = por %p84, %p85
    %p88 = scmp.ne.s32.totalorder %s71, %s87
    %p89 = scmp.eq.s32.totalorder %s16, 0
    %p90 = por %p88, %p89
    %s91 = ssub.s32 %s10, %s17
    %p92 = scmp.eq.s32.totalorder %s91, 0
    %s94 = sadd.s32 %s93, 1
    %s95 = scalar_select %p92, %s93, %s94
    %p98 = pneg %p92
    %p99 = scmp.eq.s32.totalorder %s10, 2
    %p100 = por %p98, %p99
    %p101 = scmp.ne.s32.totalorder %s93, %s96
    %p102 = scmp.eq.s32.totalorder %s10, 0
    %p103 = por %p101, %p102
    %p104 = scmp.ne.s32.totalorder %s93, %s96
    %p105 = scmp.eq.s32.totalorder %s15, 2
    %p106 = por %p104, %p105
    %p107 = scmp.ne.s32.totalorder %s96, %s97
    %p108 = scmp.eq.s32.totalorder %s15, 0
    %p109 = por %p107, %p108
    %p110 = scmp.ne.s32.totalorder %s96, %s97
    %p111 = scmp.eq.s32.totalorder %s16, 2
    %p112 = por %p110, %p111
    %p114 = scmp.ne.s32.totalorder %s97, %s113
    %p115 = scmp.eq.s32.totalorder %s16, 0
    %p116 = por %p114, %p115
    %s117 = ssub.s32 %s10, %s17
    %p118 = scmp.eq.s32.totalorder %s117, 0
    %s120 = sadd.s32 %s119, 1
    %s121 = scalar_select %p118, %s119, %s120
    %p124 = pneg %p118
    %p125 = scmp.eq.s32.totalorder %s10, 2
    %p126 = por %p124, %p125
    %p127 = scmp.ne.s32.totalorder %s119, %s122
    %p128 = scmp.eq.s32.totalorder %s10, 0
    %p129 = por %p127, %p128
    %p130 = scmp.ne.s32.totalorder %s119, %s122
    %p131 = scmp.eq.s32.totalorder %s15, 2
    %p132 = por %p130, %p131
    %p133 = scmp.ne.s32.totalorder %s122, %s123
    %p134 = scmp.eq.s32.totalorder %s15, 0
    %p135 = por %p133, %p134
    %p136 = scmp.ne.s32.totalorder %s122, %s123
    %p137 = scmp.eq.s32.totalorder %s16, 2
    %p138 = por %p136, %p137
    %p140 = scmp.ne.s32.totalorder %s123, %s139
    %p141 = scmp.eq.s32.totalorder %s16, 0
    %p142 = por %p140, %p141
    %p143 = scmp.le.s32.totalorder 1, %s10
    %p144 = scmp.lt.s32.totalorder %s10, 4
    %p145 = pnand %p143, %p144
    %p146 = pneg %p145
    // Predicated region
    $region9: #{cpc_forward.5} parent=5 // pred_check
      _
    $region10: #{cpc_forward.5} parent=5 // pred_check_branch
      %148 = sbr.rel (%p145) target = $region12
    $region11: #{cpc_forward.5} parent=5 // pred_region
      %s149 = ssub.s32 %s10, 1
      // Predicated region
      $region13: #{cpc_forward.5} parent=11 // pred_check
        %p150 = pneg %p31
      $region14: #{cpc_forward.5} parent=11 // pred_check_branch
        %152 = sbr.rel (%p150) target = $region16
      $region15: #{cpc_forward.5} parent=11 // pred_region
        _
      $region16: #{cpc_forward.5} parent=11 // pred_fallthru
        _
    $region12: #{cpc_forward.5} parent=5 // pred_fallthru
      _
    %p153 = scmp.lt.s32.totalorder %s10, 3
    // Predicated region
    $region17: #{cpc_forward.5} parent=5 // pred_check
      %p154 = pneg %p153
    $region18: #{cpc_forward.5} parent=5 // pred_check_branch
      %156 = sbr.rel (%p154) target = $region20
    $region19: #{cpc_forward.5} parent=5 // pred_region
      // Predicated region
      $region21: #{cpc_forward.5} parent=19 // pred_check
        %p157 = pneg %p51
      $region22: #{cpc_forward.5} parent=19 // pred_check_branch
        %159 = sbr.rel (%p157) target = $region24
      $region23: #{cpc_forward.5} parent=19 // pred_region
        %p160 = scmp.lt.s32.totalorder %s10, 2
        %s161 = scalar_select %p160, %s10, 2
        %s162 = smul.addr %s161, 4
        %s163 = smul.addr %s162, 4
        %s164 = scalar_lea.vmem %s1, %s163
      $region24: #{cpc_forward.5} parent=19 // pred_fallthru
        _
      // Predicated region
      $region25: #{cpc_forward.5} parent=19 // pred_check
        %p165 = pneg %p77
      $region26: #{cpc_forward.5} parent=19 // pred_check_branch
        %167 = sbr.rel (%p165) target = $region28
      $region27: #{cpc_forward.5} parent=19 // pred_region
        %p168 = scmp.lt.s32.totalorder %s10, 2
        %s169 = scalar_select %p168, %s10, 2
        %s170 = scalar_lea.vmem %s2, %s169
      $region28: #{cpc_forward.5} parent=19 // pred_fallthru
        _
      // Predicated region
      $region29: #{cpc_forward.5} parent=19 // pred_check
        %p171 = pneg %p103
      $region30: #{cpc_forward.5} parent=19 // pred_check_branch
        %173 = sbr.rel (%p171) target = $region32
      $region31: #{cpc_forward.5} parent=19 // pred_region
        %p174 = scmp.lt.s32.totalorder %s10, 2
        %s175 = scalar_select %p174, %s10, 2
        %s176 = smul.addr %s175, 4
        %s177 = smul.addr %s176, 4
        %s178 = scalar_lea.vmem %s3, %s177
      $region32: #{cpc_forward.5} parent=19 // pred_fallthru
        _
    $region20: #{cpc_forward.5} parent=5 // pred_fallthru
      _
    %p179 = scmp.le.s32.totalorder 1, %s10
    %p180 = scmp.lt.s32.totalorder %s10, 4
    %p181 = pnand %p179, %p180
    %p182 = pneg %p181
    // Predicated region
    $region33: #{cpc_forward.5} parent=5 // pred_check
      _
    $region34: #{cpc_forward.5} parent=5 // pred_check_branch
      %184 = sbr.rel (%p181) target = $region36
    $region35: #{cpc_forward.5} parent=5 // pred_region
      %s185 = ssub.s32 %s10, 1
      %p186 = pneg %p31
      %p187 = pneg %p28
      %p188 = scmp.lt.s32.totalorder %s15, 2
      %s189 = scalar_select %p188, %s15, 2
      %s190 = smul.addr %s189, 4
      %s191 = smul.addr %s190, 4
      %s192 = scalar_lea.vmem %s1, %s191
      %p193 = pneg %p57
      %p194 = pneg %p54
      %p195 = scmp.lt.s32.totalorder %s15, 2
      %s196 = scalar_select %p195, %s15, 2
      %s197 = scalar_lea.vmem %s2, %s196
      %p198 = pneg %p83
      %p199 = pneg %p80
      %p200 = scmp.lt.s32.totalorder %s15, 2
      %s201 = scalar_select %p200, %s15, 2
      %s202 = smul.addr %s201, 4
      %s203 = smul.addr %s202, 4
      %s204 = scalar_lea.vmem %s3, %s203
      %p205 = pneg %p109
      %p206 = pneg %p106
      %p207 = pneg %p135
      %p208 = pneg %p132
      %p209 = scmp.lt.s32.totalorder %s15, 2
      %s210 = scalar_select %p209, %s15, 2
      %s211 = scalar_lea.vmem %s4, %s210
      %p212 = scmp.lt.s32.totalorder %s15, 2
      %s213 = scalar_select %p212, %s15, 2
      %s214 = smul.addr %s213, 4
      %s215 = smul.addr %s214, 4
      %s216 = scalar_lea.vmem %s1, %s215
      %p217 = scmp.lt.s32.totalorder %s15, 2
      %s218 = scalar_select %p217, %s15, 2
      %s219 = scalar_lea.vmem %s2, %s218
      %p220 = scmp.lt.s32.totalorder %s15, 2
      %s221 = scalar_select %p220, %s15, 2
      %s222 = smul.addr %s221, 4
      %s223 = smul.addr %s222, 4
      %s224 = scalar_lea.vmem %s3, %s223
      %p225 = scmp.lt.s32.totalorder %s15, 2
      %s226 = scalar_select %p225, %s15, 2
      %s227 = scalar_lea.vmem %s4, %s226
      %v229 = vld [vmem:[%s0] sm:$0xf]
      %v230 = vld [vmem:[%s0 + $0x4] sm:$0x7]
      %v231 = vld [vmem:[%s216] sm:$0xf]
      %v232 = vld [vmem:[%s216 + $0x4] sm:$0xf]
      %v233 = vld [vmem:[%s216 + $0x8] sm:$0xf]
      %v234 = vld [vmem:[%s216 + $0xc] sm:$0xf]
      %v235 = vld [vmem:[%s219] sm:$0x1]
      %v237 = vlaneseq
      %v238 = vshrl.u32 %v237, 7
      %v239 = vsub.s32 0, %v238
      %v240 = vrot.slane %v235, %v239
      %v244 = vunpack.c.l.b16 %v229
      %v245 = vunpack.c.l.b16 %v230
      %v246 = vpack.c.b16 %v245, %v244
      %v251 = vunpack.c.l.b16 %v231
      %v252 = vunpack.c.l.b16 %v232
      %v253 = vunpack.c.l.b16 %v233
      %v254 = vunpack.c.l.b16 %v234
      %v255 = vpack.c.b16 %v252, %v251
      %v256 = vpack.c.b16 %v254, %v253
      %vm259 = vcmask 261120
      %v261 = vsel %vm259, %v246, 0
      %263 = vmatprep.subr.bf16.mxu0 0
      %264 = vmatpush1.bf16.msra.mxu0 %v255
      %265 = vmatprep.subr.bf16.mxu0 0
      %266 = vmatpush1.bf16.msra.mxu0 %v256
      %267 = vmatprep.subr.bf16.mxu0 0
      %268 = vmatpush1.bf16.msra.mxu0 0
      %269 = vmatprep.subr.bf16.mxu0 0
      %270 = vmatpush1.bf16.msra.mxu0 0
      %271 = vmatprep.subr.bf16.mxu0 0
      %272 = vmatpush1.bf16.msra.mxu0 0
      %273 = vmatprep.subr.bf16.mxu0 0
      %274 = vmatpush1.bf16.msra.mxu0 0
      %275 = vmatprep.subr.bf16.mxu0 0
      %276 = vmatpush1.bf16.msra.mxu0 0
      %277 = vmatprep.subr.bf16.mxu0 0
      %278 = vmatpush1.bf16.msra.mxu0 0
      %279 = vmatprep.subr.bf16.mxu0 0
      %280 = vmatpush1.bf16.msra.mxu0 0
      %281 = vmatprep.subr.bf16.mxu0 0
      %282 = vmatpush1.bf16.msra.mxu0 0
      %283 = vmatprep.subr.bf16.mxu0 0
      %284 = vmatpush1.bf16.msra.mxu0 0
      %285 = vmatprep.subr.bf16.mxu0 0
      %286 = vmatpush1.bf16.msra.mxu0 0
      %287 = vmatprep.subr.bf16.mxu0 0
      %288 = vmatpush1.bf16.msra.mxu0 0
      %289 = vmatprep.subr.bf16.mxu0 0
      %290 = vmatpush1.bf16.msra.mxu0 0
      %291 = vmatprep.subr.bf16.mxu0 0
      %292 = vmatpush1.bf16.msra.mxu0 0
      %293 = vmatprep.subr.bf16.mxu0 0
      %294 = vmatpush1.bf16.msra.mxu0 0
      %295 = vmatprep.mubr.bf16.mxu0 0
      %296 = vmatmul.mubr.bf16.gmra.mrb[0].mxu0 %v261
      %v297 = vpop.f32.mrb[0].mxu0
      %v298 = vadd.f32 %v240, %v297
      %v299 = vpop.f32.mrb[0].mxu0
      %v300 = vpop.f32.mrb[0].mxu0
      %v301 = vadd.f32 %v240, %v300
      %v302 = vpop.f32.mrb[0].mxu0
      %303 = vdwg.mxu0
      %v304 = vpack.c.bf16 %v301, %v298
      %v305 = vld [vmem:[%s224] sm:$0xf]
      %v306 = vld [vmem:[%s224 + $0x4] sm:$0xf]
      %v307 = vld [vmem:[%s224 + $0x8] sm:$0xf]
      %v308 = vld [vmem:[%s224 + $0xc] sm:$0xf]
      %v313 = vunpack.c.l.b16 %v305
      %v314 = vunpack.c.l.b16 %v306
      %v315 = vunpack.c.l.b16 %v307
      %v316 = vunpack.c.l.b16 %v308
      %v317 = vpack.c.b16 %v314, %v313
      %v318 = vpack.c.b16 %v316, %v315
      %v322 = vsel %vm259, %v304, 0
      %324 = vmatprep.subr.bf16.mxu0 0
      %325 = vmatpush1.bf16.msra.mxu0 %v317
      %326 = vmatprep.subr.bf16.mxu0 0
      %327 = vmatpush1.bf16.msra.mxu0 %v318
      %328 = vmatprep.subr.bf16.mxu0 0
      %329 = vmatpush1.bf16.msra.mxu0 0
      %330 = vmatprep.subr.bf16.mxu0 0
      %331 = vmatpush1.bf16.msra.mxu0 0
      %332 = vmatprep.subr.bf16.mxu0 0
      %333 = vmatpush1.bf16.msra.mxu0 0
      %334 = vmatprep.subr.bf16.mxu0 0
      %335 = vmatpush1.bf16.msra.mxu0 0
      %336 = vmatprep.subr.bf16.mxu0 0
      %337 = vmatpush1.bf16.msra.mxu0 0
      %338 = vmatprep.subr.bf16.mxu0 0
      %339 = vmatpush1.bf16.msra.mxu0 0
      %340 = vmatprep.subr.bf16.mxu0 0
      %341 = vmatpush1.bf16.msra.mxu0 0
      %342 = vmatprep.subr.bf16.mxu0 0
      %343 = vmatpush1.bf16.msra.mxu0 0
      %344 = vmatprep.subr.bf16.mxu0 0
      %345 = vmatpush1.bf16.msra.mxu0 0
      %346 = vmatprep.subr.bf16.mxu0 0
      %347 = vmatpush1.bf16.msra.mxu0 0
      %348 = vmatprep.subr.bf16.mxu0 0
      %349 = vmatpush1.bf16.msra.mxu0 0
      %350 = vmatprep.subr.bf16.mxu0 0
      %351 = vmatpush1.bf16.msra.mxu0 0
      %352 = vmatprep.subr.bf16.mxu0 0
      %353 = vmatpush1.bf16.msra.mxu0 0
      %354 = vmatprep.subr.bf16.mxu0 0
      %355 = vmatpush1.bf16.msra.mxu0 0
      %356 = vmatprep.mubr.bf16.mxu0 0
      %357 = vmatmul.mubr.bf16.gmra.mrb[0].mxu0 %v322
      %v358 = vpop.f32.mrb[0].mxu0
      %v359 = vadd.f32 0.0, %v358
      %v360 = vpop.f32.mrb[0].mxu0
      %v361 = vpop.f32.mrb[0].mxu0
      %v362 = vadd.f32 0.0, %v361
      %v363 = vpop.f32.mrb[0].mxu0
      %364 = vdwg.mxu0
      %v365 = vlaneseq
      %v366 = vshrl.u32 %v365, 7
      %v367 = vadd.s32 %v366, 8
      %v368 = vlaneseq
      %v369 = vand.u32 %v368, 127
      %vm370 = vcmp.eq.s32.totalorder %v366, %v369
      %vm371 = vcmp.eq.s32.totalorder %v367, %v369
      %vm372 = vcmp.lt.s32.totalorder %v369, %v366
      %vm373 = vcmp.lt.s32.totalorder %v369, %v367
      %vm374 = vcmask 113664
      %v375 = vsel %vm374, %v359, -inf
      %376 = vmax.xlane.f32.xlu0 %v375
      %v377 = vpop.xlane.xlu0 %376
      %vm378 = vcmask 111616
      %v379 = vsel %vm378, %v362, -inf
      %380 = vmax.xlane.f32.xlu0 %v379
      %v381 = vpop.xlane.xlu0 %380
      %v382 = vsub.f32 %v359, %v377
      %v383 = vsub.f32 %v362, %v381
      %v384 = vmul.f32 %v382, 1.442695
      %v385 = vpow.pop %v384
      %v386 = vmul.f32 %v383, 1.442695
      %v387 = vpow.pop %v386
      %v388 = vsel %vm374, %v385, 0.0
      %389 = vadd.xlane.f32.xlu0 %v388
      %v390 = vpop.xlane.xlu0 %389
      %v391 = vsel %vm378, %v387, 0.0
      %392 = vadd.xlane.f32.xlu0 %v391
      %v393 = vpop.xlane.xlu0 %392
      %v394 = vlog2.pop %v390
      %v395 = vmul.f32 %v394, 0.6931472
      %v396 = vlog2.pop %v393
      %v397 = vmul.f32 %v396, 0.6931472
      %v398 = vsel %vm370, %v359, 0.0
      %v399 = vsel %vm371, %v362, 0.0
      %v400 = vsel %vm374, %v398, 0.0
      %401 = vadd.xlane.f32.xlu0 %v400
      %v402 = vpop.xlane.xlu0 %401
      %v403 = vsel %vm378, %v399, 0.0
      %404 = vadd.xlane.f32.xlu0 %v403
      %v405 = vpop.xlane.xlu0 %404
      %v406 = vsub.f32 %v402, %v377
      %v407 = vsub.f32 %v405, %v381
      %v408 = vsub.f32 %v406, %v395
      %v409 = vsub.f32 %v407, %v397
      %vm410 = vcmask 7168
      %v411 = vsel %vm410, %v408, 0.0
      %vm412 = vcmask 5120
      %v413 = vsel %vm412, %v409, 0.0
      %v414 = vadd.f32 %v411, %v413
      %415 = vadd.xlane.f32.xlu0 %v414
      %v416 = vpop.xlane.xlu0 %415
      %v417 = vrot.slane %v416, 4
      %v418 = vadd.f32 %v416, %v417
      %v419 = vrot.slane %v418, 2
      %v420 = vadd.f32 %v418, %v419
      %v421 = vrot.slane %v420, 1
      %v422 = vadd.f32 %v420, %v421
      %s423 = vtos %v422
      %vm424 = vcmp.ge.f32.partialorder %v359, %v377
      %vm425 = vcmp.ge.f32.partialorder %v362, %v381
      %vm426 = vmand %vm372, %vm424
      %vm427 = vmand %vm373, %vm425
      %v428 = vsel %vm426, 1.0, 0.0
      %v429 = vsel %vm427, 1.0, 0.0
      %v430 = vsel %vm374, %v428, 0.0
      %431 = vadd.xlane.f32.xlu0 %v430
      %v432 = vpop.xlane.xlu0 %431
      %v433 = vsel %vm378, %v429, 0.0
      %434 = vadd.xlane.f32.xlu0 %v433
      %v435 = vpop.xlane.xlu0 %434
      %vm436 = vcmp.ge.f32.partialorder %v402, %v377
      %vm437 = vcmp.ge.f32.partialorder %v405, %v381
      %vm438 = vcmp.eq.f32.partialorder %v432, 0.0
      %vm439 = vcmp.eq.f32.partialorder %v435, 0.0
      %vm440 = vmand %vm436, %vm438
      %vm441 = vmand %vm437, %vm439
      %v442 = vsel %vm440, 1.0, 0.0
      %v443 = vsel %vm441, 1.0, 0.0
      %v444 = vsel %vm410, %v442, 0.0
      %v445 = vsel %vm412, %v443, 0.0
      %v446 = vadd.f32 %v444, %v445
      %447 = vadd.xlane.f32.xlu0 %v446
      %v448 = vpop.xlane.xlu0 %447
      %v449 = vrot.slane %v448, 4
      %v450 = vadd.f32 %v448, %v449
      %v451 = vrot.slane %v450, 2
      %v452 = vadd.f32 %v450, %v451
      %v453 = vrot.slane %v452, 1
      %v454 = vadd.f32 %v452, %v453
      %s455 = vtos %v454
      %s456 = smul.f32 %s455, 0.071428575
      %vm457 = vcmp.eq.s32.totalorder %v369, 0
      %vm458 = vcmp.eq.s32.totalorder %v369, 1
      %v459 = vstv %s456
      %v460 = vsel %vm458, %v459, 0.0
      %v461 = vstv %s423
      %v462 = vsel %vm457, %v461, %v460
      %463 = vst [vmem:[%s227] sm:$0x1] %v462
      %p464 = scmp.lt.s32.totalorder %s15, 2
      %s465 = scalar_select %p464, %s15, 2
      %s466 = scalar_lea.vmem %s4, %s465
      // Predicated region
      $region37: #{cpc_forward.5} parent=35 // pred_check
        %p467 = pneg %p132
      $region38: #{cpc_forward.5} parent=35 // pred_check_branch
        %469 = sbr.rel (%p467) target = $region40
      $region39: #{cpc_forward.5} parent=35 // pred_region
        _
      $region40: #{cpc_forward.5} parent=35 // pred_fallthru
        _
    $region36: #{cpc_forward.5} parent=5 // pred_fallthru
      _
    %p470 = scmp.le.s32.totalorder 2, %s10
    // Predicated region
    $region41: #{cpc_forward.5} parent=5 // pred_check
      %p471 = pneg %p470
    $region42: #{cpc_forward.5} parent=5 // pred_check_branch
      %473 = sbr.rel (%p471) target = $region44
    $region43: #{cpc_forward.5} parent=5 // pred_region
      %s474 = ssub.s32 %s10, 2
      // Predicated region
      $region45: #{cpc_forward.5} parent=43 // pred_check
        %p475 = pneg %p138
      $region46: #{cpc_forward.5} parent=43 // pred_check_branch
        %477 = sbr.rel (%p475) target = $region48
      $region47: #{cpc_forward.5} parent=43 // pred_region
        %p478 = scmp.lt.s32.totalorder %s16, 2
        %s479 = scalar_select %p478, %s16, 2
        %s480 = scalar_lea.vmem %s4, %s479
      $region48: #{cpc_forward.5} parent=43 // pred_fallthru
        _
    $region44: #{cpc_forward.5} parent=5 // pred_fallthru
      _
  $region6: #{cpc_forward.5} parent=0 // loop_footer
    %s14 = sadd.s32 1, %s10
  $region7: #{cpc_forward.5} parent=0 // loop_footer_branch
    %9 = sbr.rel target = $region3
  $region8: #{cpc_forward.5} parent=0 // loop_exit
    _

</llo_original>
